<compile_context>
chip_gen: v5e
topology: v5e:2x2
jax: 0.10.0
libtpu: 0.0.40
codegen_flags: <defaults>
</compile_context>

<pallas_src>
import jax
import jax.numpy as jnp
from jax import lax
from jax.experimental import pallas as pl
from jax.experimental.pallas import tpu as pltpu


def style_encoder_gru_kernel(x_ref, cw1_ref, cw2_ref, cb_ref,
                             wih_ref, whh_ref, gb_ref, wp_ref, bp_ref,
                             o_ref, pad1_scr, pad2_scr, gx_scr):
    """One grid step == one batch row.

    Block shapes seen by the kernel:
      x_ref   (1, L, Cin)     cw1_ref (3, Cin, H)    cw2_ref (3, H, H)
      cb_ref  (2, H)          wih_ref (2, H, 3H)     whh_ref (2, H, 3H)
      gb_ref  (2, 2, 3H)      wp_ref  (2H, S)        bp_ref  (1, S)
      o_ref   (1, 1, S)
      pad1_scr (L+2, Cin)     pad2_scr (L+2, H)      gx_scr (L, 3H)
    """
    _, L, Cin = x_ref.shape
    H = cb_ref.shape[1]
    f32 = jnp.float32

    def mm(a, b):
        return jnp.dot(a, b, preferred_element_type=f32)

    # -------- Conv1d(k=3, stride=1, pad=1) + ReLU, twice --------------------
    # Zero-padded VMEM scratch; the three taps become row-shifted MXU matmuls.
    xb = x_ref[0]                                         # (L, Cin)
    pad1_scr[0:1, :] = jnp.zeros((1, Cin), f32)
    pad1_scr[L + 1:L + 2, :] = jnp.zeros((1, Cin), f32)
    pad1_scr[1:L + 1, :] = xb

    cb = cb_ref[...]                                      # (2, H)
    h1 = (mm(pad1_scr[0:L, :], cw1_ref[0])                # x[t-1] tap
          + mm(xb, cw1_ref[1])                            # x[t]   tap
          + mm(pad1_scr[2:L + 2, :], cw1_ref[2])          # x[t+1] tap
          + cb[0:1, :])
    h1 = jnp.maximum(h1, 0.0)                             # (L, H)

    pad2_scr[0:1, :] = jnp.zeros((1, H), f32)
    pad2_scr[L + 1:L + 2, :] = jnp.zeros((1, H), f32)
    pad2_scr[1:L + 1, :] = h1
    h2 = (mm(pad2_scr[0:L, :], cw2_ref[0])
          + mm(h1, cw2_ref[1])
          + mm(pad2_scr[2:L + 2, :], cw2_ref[2])
          + cb[1:2, :])
    h2 = jnp.maximum(h2, 0.0)                             # (L, H)

    # -------- GRU (PyTorch gate order r, z, n), gates stacked 3H-wide -------
    # Forward direction: hoist ALL input->hidden projections out of the loop.
    gb_f = gb_ref[0]                                      # (2, 3H)
    gx_scr[...] = mm(h2, wih_ref[0]) + gb_f[0:1, :]       # (L, 3H) x-side gates
    whh_f = whh_ref[0]                                    # (H, 3H) loop-invariant
    bhn_f = gb_f[1:2, 2 * H:]                             # (1, H)  = b_hh_n

    h0 = jnp.zeros((1, H), f32)

    def step(t, h):
        g_x = gx_scr[pl.ds(t, 1), :]                      # (1, 3H)
        g_h = mm(h, whh_f)                                # only matmul on chain
        r = jax.nn.sigmoid(g_x[:, 0:H] + g_h[:, 0:H])
        z = jax.nn.sigmoid(g_x[:, H:2 * H] + g_h[:, H:2 * H])
        n = jnp.tanh(g_x[:, 2 * H:] + r * (g_h[:, 2 * H:] + bhn_f))
        return (1.0 - z) * n + z * h

    unroll = max(u for u in (8, 4, 2, 1) if L % u == 0)   # partial unroll
    h_fwd = lax.fori_loop(0, L, step, h0, unroll=unroll)  # (1, H)

    # Reverse direction: output[:, -1] only needs ONE step on x[:, L-1] from
    # h0 = 0, so the hidden->hidden matmul vanishes entirely.
    gb_b = gb_ref[1]
    gx_b = mm(h2[L - 1:L, :], wih_ref[1]) + gb_b[0:1, :]  # (1, 3H)
    r_b = jax.nn.sigmoid(gx_b[:, 0:H])
    z_b = jax.nn.sigmoid(gx_b[:, H:2 * H])
    n_b = jnp.tanh(gx_b[:, 2 * H:] + r_b * gb_b[1:2, 2 * H:])
    h_bwd = (1.0 - z_b) * n_b                             # + z_b * 0

    # -------- projection of concat([h_fwd, h_bwd]), concat fused away -------
    o_ref[0] = (mm(h_fwd, wp_ref[0:H, :]) + mm(h_bwd, wp_ref[H:2 * H, :])
                + bp_ref[...])


def style_encoder_gru(x, params):
    """x: (B, L, input_size). Returns style embedding (B, style_embedding_size)."""
    x = x.astype(jnp.float32)
    B, L, Cin = x.shape
    H = params["conv_b"].shape[1]
    H3 = 3 * H
    S = params["proj_b"].shape[1]

    flops = B * (2 * L * 3 * Cin * H          # conv1 taps
                 + 2 * L * 3 * H * H          # conv2 taps
                 + 2 * L * H * H3             # hoisted i2h projection (fwd)
                 + 2 * L * H * H3             # recurrent h2h matmuls
                 + 2 * H * H3                 # reverse i2h (single step)
                 + 2 * 2 * H * S)             # projection
    transcendentals = B * 3 * H * (L + 1)
    bytes_accessed = 4 * (x.size + sum(int(p.size) for p in params.values())
                          + B * S)

    out = pl.pallas_call(
        style_encoder_gru_kernel,
        out_shape=jax.ShapeDtypeStruct((B, 1, S), jnp.float32),
        grid_spec=pltpu.PrefetchScalarGridSpec(
            num_scalar_prefetch=0,
            grid=(B,),
            in_specs=[
                pl.BlockSpec((1, L, Cin), lambda b: (b, 0, 0)),   # x, one row
                pl.BlockSpec((3, Cin, H), lambda b: (0, 0, 0)),   # conv1 taps
                pl.BlockSpec((3, H, H),   lambda b: (0, 0, 0)),   # conv2 taps
                pl.BlockSpec((2, H),      lambda b: (0, 0)),      # conv biases
                pl.BlockSpec((2, H, H3),  lambda b: (0, 0, 0)),   # GRU W_ih
                pl.BlockSpec((2, H, H3),  lambda b: (0, 0, 0)),   # GRU W_hh
                pl.BlockSpec((2, 2, H3),  lambda b: (0, 0, 0)),   # GRU biases
                pl.BlockSpec((2 * H, S),  lambda b: (0, 0)),      # proj weight
                pl.BlockSpec((1, S),      lambda b: (0, 0)),      # proj bias
            ],
            out_specs=pl.BlockSpec((1, 1, S), lambda b: (b, 0, 0)),
            scratch_shapes=[
                pltpu.VMEM((L + 2, Cin), jnp.float32),   # zero-padded conv1 input
                pltpu.VMEM((L + 2, H), jnp.float32),     # zero-padded conv2 input
                pltpu.VMEM((L, H3), jnp.float32),        # hoisted x-side GRU gates
            ],
        ),
        compiler_params=pltpu.CompilerParams(
            dimension_semantics=("parallel",)),          # v7x: 2 TCs split batch
        cost_estimate=pl.CostEstimate(flops=int(flops),
                                      transcendentals=int(transcendentals),
                                      bytes_accessed=int(bytes_accessed)),
    )(x, params["conv_w1"], params["conv_w2"], params["conv_b"],
      params["gru_w_ih"], params["gru_w_hh"], params["gru_b"],
      params["proj_w"], params["proj_b"])
    return jnp.squeeze(out, axis=1)                      # metadata-only squeeze


def init_params(key, input_size, hidden_size, style_embedding_size):
    """Deterministic init directly in the packed layout the kernel expects."""
    H, S, C = hidden_size, style_embedding_size, input_size
    H3 = 3 * H
    ks = jax.random.split(key, 9)

    def u(k, shape, fan_in):
        bound = 1.0 / float(fan_in) ** 0.5
        return jax.random.uniform(k, shape, jnp.float32, -bound, bound)

    b_ih = u(ks[5], (2, H3), H)            # torch bias_ih_l0{,_reverse}, [r|z|n]
    b_hh = u(ks[6], (2, H3), H)            # torch bias_hh_l0{,_reverse}, [r|z|n]
    # Pre-sum the r/z bias pairs (they always appear added together); the
    # n-gate hidden bias stays separate (inside the reset-gate product).
    gru_b = jnp.stack(
        [jnp.concatenate([b_ih[:, :2 * H] + b_hh[:, :2 * H], b_ih[:, 2 * H:]], axis=1),
         jnp.concatenate([jnp.zeros((2, 2 * H), jnp.float32), b_hh[:, 2 * H:]], axis=1)],
        axis=1)                            # (2, 2, 3H)

    return {
        "conv_w1": u(ks[0], (3, C, H), 3 * C),   # tap k == conv1.weight[:, :, k].T
        "conv_w2": u(ks[1], (3, H, H), 3 * H),
        "conv_b":  u(ks[2], (2, H), 3 * H),      # row 0: conv1.bias, row 1: conv2.bias
        "gru_w_ih": u(ks[3], (2, H, H3), H),     # [dir, in, r|z|n] == W_ih.T
        "gru_w_hh": u(ks[4], (2, H, H3), H),
        "gru_b":   gru_b,
        "proj_w":  u(ks[7], (2 * H, S), 2 * H),  # linear.weight.T
        "proj_b":  u(ks[8], (1, S), 2 * H),
    }


def reference(x, params):
    """Pure-JAX re-statement of the PyTorch forward (FULL bidirectional GRU)."""
    x = x.astype(jnp.float32)
    B, L, _ = x.shape
    H = params["conv_b"].shape[1]

    def conv_relu(inp, taps, bias):                 # (B, L, C) -> (B, L, H)
        xp = jnp.pad(inp, ((0, 0), (1, 1), (0, 0)))
        y = (xp[:, 0:L] @ taps[0] + xp[:, 1:L + 1] @ taps[1]
             + xp[:, 2:L + 2] @ taps[2] + bias)
        return jax.nn.relu(y)

    h = conv_relu(x, params["conv_w1"], params["conv_b"][0])
    h = conv_relu(h, params["conv_w2"], params["conv_b"][1])

    def cell(x_t, s, d):
        gx = x_t @ params["gru_w_ih"][d] + params["gru_b"][d, 0]
        gh = s @ params["gru_w_hh"][d] + params["gru_b"][d, 1]
        r = jax.nn.sigmoid(gx[:, :H] + gh[:, :H])
        z = jax.nn.sigmoid(gx[:, H:2 * H] + gh[:, H:2 * H])
        n = jnp.tanh(gx[:, 2 * H:] + r * gh[:, 2 * H:])
        return (1.0 - z) * n + z * s

    s = jnp.zeros((B, H), jnp.float32)
    for t in range(L):                              # forward direction
        s = cell(h[:, t], s, 0)
    fwd_last = s

    s = jnp.zeros((B, H), jnp.float32)
    bwd_at_last = None
    for t in range(L - 1, -1, -1):                  # full reverse direction
        s = cell(h[:, t], s, 1)
        if t == L - 1:
            bwd_at_last = s

    last = jnp.concatenate([fwd_last, bwd_at_last], axis=-1)   # output[:, -1]
    return last @ params["proj_w"] + params["proj_b"]


if __name__ == "__main__":
    batch, seq_len = 2, 8
    input_size, hidden_size, style_embedding_size = 16, 32, 16

    key = jax.random.PRNGKey(0)
    kx, kp = jax.random.split(key)
    x = jax.random.normal(kx, (batch, seq_len, input_size), jnp.float32)
    params = init_params(kp, input_size, hidden_size, style_embedding_size)

    out = jax.block_until_ready(style_encoder_gru(x, params))
    ref = reference(x, params)

    assert out.shape == (batch, style_embedding_size), out.shape
    err = float(jnp.max(jnp.abs(out - ref)))
    assert jnp.allclose(out, ref, atol=1e-4, rtol=1e-4), err
    print("KERNEL_OK")
</pallas_src>

<mosaic_0001>
module attributes {stable_mosaic.version = 11 : i64} {
  func.func @style_encoder_gru_kernel(%arg0: i32, %arg1: memref<1x8x16xf32, #tpu.memory_space<vmem>>, %arg2: memref<3x16x32xf32, #tpu.memory_space<vmem>>, %arg3: memref<3x32x32xf32, #tpu.memory_space<vmem>>, %arg4: memref<2x32xf32, #tpu.memory_space<vmem>>, %arg5: memref<2x32x96xf32, #tpu.memory_space<vmem>>, %arg6: memref<2x32x96xf32, #tpu.memory_space<vmem>>, %arg7: memref<2x2x96xf32, #tpu.memory_space<vmem>>, %arg8: memref<64x16xf32, #tpu.memory_space<vmem>>, %arg9: memref<1x16xf32, #tpu.memory_space<vmem>>, %arg10: memref<1x1x16xf32, #tpu.memory_space<vmem>>, %arg11: memref<10x16xf32, #tpu.memory_space<vmem>>, %arg12: memref<10x32xf32, #tpu.memory_space<vmem>>, %arg13: memref<8x96xf32, #tpu.memory_space<vmem>>) attributes {dimension_semantics = [#tpu.dimension_semantics<parallel>], iteration_bounds = array<i64: 2>, scalar_prefetch = 0 : i64, scratch_operands = 3 : i64, tpu.core_type = #tpu.core_type<tc>, window_params = [{transform_indices = @transform_0, window_bounds = array<i64: 1, 8, 16>}, {pipeline_mode = #tpu.pipeline_mode<synchronous>, transform_indices = @transform_1, window_bounds = array<i64: 3, 16, 32>}, {pipeline_mode = #tpu.pipeline_mode<synchronous>, transform_indices = @transform_2, window_bounds = array<i64: 3, 32, 32>}, {pipeline_mode = #tpu.pipeline_mode<synchronous>, transform_indices = @transform_3, window_bounds = array<i64: 2, 32>}, {pipeline_mode = #tpu.pipeline_mode<synchronous>, transform_indices = @transform_4, window_bounds = array<i64: 2, 32, 96>}, {pipeline_mode = #tpu.pipeline_mode<synchronous>, transform_indices = @transform_5, window_bounds = array<i64: 2, 32, 96>}, {pipeline_mode = #tpu.pipeline_mode<synchronous>, transform_indices = @transform_6, window_bounds = array<i64: 2, 2, 96>}, {pipeline_mode = #tpu.pipeline_mode<synchronous>, transform_indices = @transform_7, window_bounds = array<i64: 64, 16>}, {pipeline_mode = #tpu.pipeline_mode<synchronous>, transform_indices = @transform_8, window_bounds = array<i64: 1, 16>}, {transform_indices = @transform_9, window_bounds = array<i64: 1, 1, 16>}]} {
    %c0 = arith.constant 0 : index
    %c0_0 = arith.constant 0 : index
    %c0_1 = arith.constant 0 : index
    %0 = vector.load %arg1[%c0, %c0_0, %c0_1] : memref<1x8x16xf32, #tpu.memory_space<vmem>>, vector<1x8x16xf32>
    %1 = vector.shape_cast %0 : vector<1x8x16xf32> to vector<8x16xf32>
    %cst = arith.constant 0.000000e+00 : f32
    %2 = vector.broadcast %cst : f32 to vector<1x16xf32>
    %c0_2 = arith.constant 0 : index
    %c0_3 = arith.constant 0 : index
    %3 = vector.load %arg11[%c0_2, %c0_3] : memref<10x16xf32, #tpu.memory_space<vmem>>, vector<1x16xf32>
    tpu.vector_store %arg11[%c0_2, %c0_3], %2 {strides = array<i32>} : memref<10x16xf32, #tpu.memory_space<vmem>>, vector<1x16xf32>,
    %cst_4 = arith.constant 0.000000e+00 : f32
    %4 = vector.broadcast %cst_4 : f32 to vector<1x16xf32>
    %c9 = arith.constant 9 : index
    %c0_5 = arith.constant 0 : index
    %5 = vector.load %arg11[%c9, %c0_5] : memref<10x16xf32, #tpu.memory_space<vmem>>, vector<1x16xf32>
    tpu.vector_store %arg11[%c9, %c0_5], %4 {strides = array<i32>} : memref<10x16xf32, #tpu.memory_space<vmem>>, vector<1x16xf32>,
    %c1 = arith.constant 1 : index
    %c0_6 = arith.constant 0 : index
    %6 = vector.load %arg11[%c1, %c0_6] : memref<10x16xf32, #tpu.memory_space<vmem>>, vector<8x16xf32>
    tpu.vector_store %arg11[%c1, %c0_6], %1 {strides = array<i32>} : memref<10x16xf32, #tpu.memory_space<vmem>>, vector<8x16xf32>,
    %c0_7 = arith.constant 0 : index
    %c0_8 = arith.constant 0 : index
    %7 = vector.load %arg4[%c0_7, %c0_8] : memref<2x32xf32, #tpu.memory_space<vmem>>, vector<2x32xf32>
    %c0_9 = arith.constant 0 : index
    %c0_10 = arith.constant 0 : index
    %8 = vector.load %arg11[%c0_9, %c0_10] : memref<10x16xf32, #tpu.memory_space<vmem>>, vector<8x16xf32>
    %c0_11 = arith.constant 0 : index
    %c0_12 = arith.constant 0 : index
    %c0_13 = arith.constant 0 : index
    %9 = vector.load %arg2[%c0_11, %c0_12, %c0_13] : memref<3x16x32xf32, #tpu.memory_space<vmem>>, vector<1x16x32xf32>
    %10 = vector.shape_cast %9 : vector<1x16x32xf32> to vector<16x32xf32>
    %cst_14 = arith.constant dense<0.000000e+00> : vector<8x32xf32>
    %11 = tpu.matmul %8, %10, %cst_14 {dimension_numbers = #tpu.dot_dimension_numbers<[1], [0], [0], [1], [0, 0, 1, 1], [], []>} : vector<8x16xf32>, vector<16x32xf32>, vector<8x32xf32> -> vector<8x32xf32>
    %c1_15 = arith.constant 1 : index
    %c0_16 = arith.constant 0 : index
    %c0_17 = arith.constant 0 : index
    %12 = vector.load %arg2[%c1_15, %c0_16, %c0_17] : memref<3x16x32xf32, #tpu.memory_space<vmem>>, vector<1x16x32xf32>
    %13 = vector.shape_cast %12 : vector<1x16x32xf32> to vector<16x32xf32>
    %cst_18 = arith.constant dense<0.000000e+00> : vector<8x32xf32>
    %14 = tpu.matmul %1, %13, %cst_18 {dimension_numbers = #tpu.dot_dimension_numbers<[1], [0], [0], [1], [0, 0, 1, 1], [], []>} : vector<8x16xf32>, vector<16x32xf32>, vector<8x32xf32> -> vector<8x32xf32>
    %15 = arith.addf %11, %14 : vector<8x32xf32>
    %c2 = arith.constant 2 : index
    %c0_19 = arith.constant 0 : index
    %16 = vector.load %arg11[%c2, %c0_19] : memref<10x16xf32, #tpu.memory_space<vmem>>, vector<8x16xf32>
    %c2_20 = arith.constant 2 : index
    %c0_21 = arith.constant 0 : index
    %c0_22 = arith.constant 0 : index
    %17 = vector.load %arg2[%c2_20, %c0_21, %c0_22] : memref<3x16x32xf32, #tpu.memory_space<vmem>>, vector<1x16x32xf32>
    %18 = vector.shape_cast %17 : vector<1x16x32xf32> to vector<16x32xf32>
    %cst_23 = arith.constant dense<0.000000e+00> : vector<8x32xf32>
    %19 = tpu.matmul %16, %18, %cst_23 {dimension_numbers = #tpu.dot_dimension_numbers<[1], [0], [0], [1], [0, 0, 1, 1], [], []>} : vector<8x16xf32>, vector<16x32xf32>, vector<8x32xf32> -> vector<8x32xf32>
    %20 = arith.addf %15, %19 : vector<8x32xf32>
    %21 = vector.extract_strided_slice %7 {offsets = [0, 0], sizes = [1, 32], strides = [1, 1]} : vector<2x32xf32> to vector<1x32xf32>
    %22 = vector.broadcast %21 : vector<1x32xf32> to vector<8x32xf32>
    %23 = arith.addf %20, %22 : vector<8x32xf32>
    %cst_24 = arith.constant 0.000000e+00 : f32
    %24 = vector.broadcast %cst_24 : f32 to vector<8x32xf32>
    %25 = arith.maximumf %23, %24 : vector<8x32xf32>
    %cst_25 = arith.constant 0.000000e+00 : f32
    %26 = vector.broadcast %cst_25 : f32 to vector<1x32xf32>
    %c0_26 = arith.constant 0 : index
    %c0_27 = arith.constant 0 : index
    %27 = vector.load %arg12[%c0_26, %c0_27] : memref<10x32xf32, #tpu.memory_space<vmem>>, vector<1x32xf32>
    tpu.vector_store %arg12[%c0_26, %c0_27], %26 {strides = array<i32>} : memref<10x32xf32, #tpu.memory_space<vmem>>, vector<1x32xf32>,
    %cst_28 = arith.constant 0.000000e+00 : f32
    %28 = vector.broadcast %cst_28 : f32 to vector<1x32xf32>
    %c9_29 = arith.constant 9 : index
    %c0_30 = arith.constant 0 : index
    %29 = vector.load %arg12[%c9_29, %c0_30] : memref<10x32xf32, #tpu.memory_space<vmem>>, vector<1x32xf32>
    tpu.vector_store %arg12[%c9_29, %c0_30], %28 {strides = array<i32>} : memref<10x32xf32, #tpu.memory_space<vmem>>, vector<1x32xf32>,
    %c1_31 = arith.constant 1 : index
    %c0_32 = arith.constant 0 : index
    %30 = vector.load %arg12[%c1_31, %c0_32] : memref<10x32xf32, #tpu.memory_space<vmem>>, vector<8x32xf32>
    tpu.vector_store %arg12[%c1_31, %c0_32], %25 {strides = array<i32>} : memref<10x32xf32, #tpu.memory_space<vmem>>, vector<8x32xf32>,
    %c0_33 = arith.constant 0 : index
    %c0_34 = arith.constant 0 : index
    %31 = vector.load %arg12[%c0_33, %c0_34] : memref<10x32xf32, #tpu.memory_space<vmem>>, vector<8x32xf32>
    %c0_35 = arith.constant 0 : index
    %c0_36 = arith.constant 0 : index
    %c0_37 = arith.constant 0 : index
    %32 = vector.load %arg3[%c0_35, %c0_36, %c0_37] : memref<3x32x32xf32, #tpu.memory_space<vmem>>, vector<1x32x32xf32>
    %33 = vector.shape_cast %32 : vector<1x32x32xf32> to vector<32x32xf32>
    %cst_38 = arith.constant dense<0.000000e+00> : vector<8x32xf32>
    %34 = tpu.matmul %31, %33, %cst_38 {dimension_numbers = #tpu.dot_dimension_numbers<[1], [0], [0], [1], [0, 0, 1, 1], [], []>} : vector<8x32xf32>, vector<32x32xf32>, vector<8x32xf32> -> vector<8x32xf32>
    %c1_39 = arith.constant 1 : index
    %c0_40 = arith.constant 0 : index
    %c0_41 = arith.constant 0 : index
    %35 = vector.load %arg3[%c1_39, %c0_40, %c0_41] : memref<3x32x32xf32, #tpu.memory_space<vmem>>, vector<1x32x32xf32>
    %36 = vector.shape_cast %35 : vector<1x32x32xf32> to vector<32x32xf32>
    %cst_42 = arith.constant dense<0.000000e+00> : vector<8x32xf32>
    %37 = tpu.matmul %25, %36, %cst_42 {dimension_numbers = #tpu.dot_dimension_numbers<[1], [0], [0], [1], [0, 0, 1, 1], [], []>} : vector<8x32xf32>, vector<32x32xf32>, vector<8x32xf32> -> vector<8x32xf32>
    %38 = arith.addf %34, %37 : vector<8x32xf32>
    %c2_43 = arith.constant 2 : index
    %c0_44 = arith.constant 0 : index
    %39 = vector.load %arg12[%c2_43, %c0_44] : memref<10x32xf32, #tpu.memory_space<vmem>>, vector<8x32xf32>
    %c2_45 = arith.constant 2 : index
    %c0_46 = arith.constant 0 : index
    %c0_47 = arith.constant 0 : index
    %40 = vector.load %arg3[%c2_45, %c0_46, %c0_47] : memref<3x32x32xf32, #tpu.memory_space<vmem>>, vector<1x32x32xf32>
    %41 = vector.shape_cast %40 : vector<1x32x32xf32> to vector<32x32xf32>
    %cst_48 = arith.constant dense<0.000000e+00> : vector<8x32xf32>
    %42 = tpu.matmul %39, %41, %cst_48 {dimension_numbers = #tpu.dot_dimension_numbers<[1], [0], [0], [1], [0, 0, 1, 1], [], []>} : vector<8x32xf32>, vector<32x32xf32>, vector<8x32xf32> -> vector<8x32xf32>
    %43 = arith.addf %38, %42 : vector<8x32xf32>
    %44 = vector.extract_strided_slice %7 {offsets = [1, 0], sizes = [1, 32], strides = [1, 1]} : vector<2x32xf32> to vector<1x32xf32>
    %45 = vector.broadcast %44 : vector<1x32xf32> to vector<8x32xf32>
    %46 = arith.addf %43, %45 : vector<8x32xf32>
    %cst_49 = arith.constant 0.000000e+00 : f32
    %47 = vector.broadcast %cst_49 : f32 to vector<8x32xf32>
    %48 = arith.maximumf %46, %47 : vector<8x32xf32>
    %c0_50 = arith.constant 0 : index
    %c0_51 = arith.constant 0 : index
    %c0_52 = arith.constant 0 : index
    %49 = vector.load %arg7[%c0_50, %c0_51, %c0_52] : memref<2x2x96xf32, #tpu.memory_space<vmem>>, vector<1x2x96xf32>
    %50 = vector.shape_cast %49 : vector<1x2x96xf32> to vector<2x96xf32>
    %c0_53 = arith.constant 0 : index
    %c0_54 = arith.constant 0 : index
    %c0_55 = arith.constant 0 : index
    %51 = vector.load %arg5[%c0_53, %c0_54, %c0_55] : memref<2x32x96xf32, #tpu.memory_space<vmem>>, vector<1x32x96xf32>
    %52 = vector.shape_cast %51 : vector<1x32x96xf32> to vector<32x96xf32>
    %cst_56 = arith.constant dense<0.000000e+00> : vector<8x96xf32>
    %53 = tpu.matmul %48, %52, %cst_56 {dimension_numbers = #tpu.dot_dimension_numbers<[1], [0], [0], [1], [0, 0, 1, 1], [], []>} : vector<8x32xf32>, vector<32x96xf32>, vector<8x96xf32> -> vector<8x96xf32>
    %54 = vector.extract_strided_slice %50 {offsets = [0, 0], sizes = [1, 96], strides = [1, 1]} : vector<2x96xf32> to vector<1x96xf32>
    %55 = vector.broadcast %54 : vector<1x96xf32> to vector<8x96xf32>
    %56 = arith.addf %53, %55 : vector<8x96xf32>
    %c0_57 = arith.constant 0 : index
    %c0_58 = arith.constant 0 : index
    %57 = vector.load %arg13[%c0_57, %c0_58] : memref<8x96xf32, #tpu.memory_space<vmem>>, vector<8x96xf32>
    tpu.vector_store %arg13[%c0_57, %c0_58], %56 {strides = array<i32>} : memref<8x96xf32, #tpu.memory_space<vmem>>, vector<8x96xf32>,
    %c0_59 = arith.constant 0 : index
    %c0_60 = arith.constant 0 : index
    %c0_61 = arith.constant 0 : index
    %58 = vector.load %arg6[%c0_59, %c0_60, %c0_61] : memref<2x32x96xf32, #tpu.memory_space<vmem>>, vector<1x32x96xf32>
    %59 = vector.shape_cast %58 : vector<1x32x96xf32> to vector<32x96xf32>
    %60 = vector.extract_strided_slice %50 {offsets = [1, 64], sizes = [1, 32], strides = [1, 1]} : vector<2x96xf32> to vector<1x32xf32>
    %cst_62 = arith.constant 0.000000e+00 : f32
    %61 = vector.broadcast %cst_62 : f32 to vector<1x32xf32>
    %c0_i32 = arith.constant 0 : i32
    %62 = arith.index_cast %c0_i32 : i32 to index
    %c0_63 = arith.constant 0 : index
    %63 = vector.load %arg13[%62, %c0_63] : memref<8x96xf32, #tpu.memory_space<vmem>>, vector<1x96xf32>
    %cst_64 = arith.constant dense<0.000000e+00> : vector<1x96xf32>
    %64 = tpu.matmul %61, %59, %cst_64 {dimension_numbers = #tpu.dot_dimension_numbers<[1], [0], [0], [1], [0, 0, 1, 1], [], []>} : vector<1x32xf32>, vector<32x96xf32>, vector<1x96xf32> -> vector<1x96xf32>
    %65 = vector.extract_strided_slice %63 {offsets = [0, 0], sizes = [1, 32], strides = [1, 1]} : vector<1x96xf32> to vector<1x32xf32>
    %66 = vector.extract_strided_slice %64 {offsets = [0, 0], sizes = [1, 32], strides = [1, 1]} : vector<1x96xf32> to vector<1x32xf32>
    %67 = arith.addf %65, %66 : vector<1x32xf32>
    %68 = arith.negf %67 : vector<1x32xf32>
    %69 = math.exp %68 : vector<1x32xf32>
    %cst_65 = arith.constant 1.000000e+00 : f32
    %70 = vector.broadcast %cst_65 : f32 to vector<1x32xf32>
    %71 = arith.addf %70, %69 : vector<1x32xf32>
    %72 = arith.divf %70, %71 : vector<1x32xf32>
    %73 = vector.extract_strided_slice %63 {offsets = [0, 32], sizes = [1, 32], strides = [1, 1]} : vector<1x96xf32> to vector<1x32xf32>
    %74 = vector.extract_strided_slice %64 {offsets = [0, 32], sizes = [1, 32], strides = [1, 1]} : vector<1x96xf32> to vector<1x32xf32>
    %75 = arith.addf %73, %74 : vector<1x32xf32>
    %76 = arith.negf %75 : vector<1x32xf32>
    %77 = math.exp %76 : vector<1x32xf32>
    %cst_66 = arith.constant 1.000000e+00 : f32
    %78 = vector.broadcast %cst_66 : f32 to vector<1x32xf32>
    %79 = arith.addf %78, %77 : vector<1x32xf32>
    %80 = arith.divf %78, %79 : vector<1x32xf32>
    %81 = vector.extract_strided_slice %63 {offsets = [0, 64], sizes = [1, 32], strides = [1, 1]} : vector<1x96xf32> to vector<1x32xf32>
    %82 = vector.extract_strided_slice %64 {offsets = [0, 64], sizes = [1, 32], strides = [1, 1]} : vector<1x96xf32> to vector<1x32xf32>
    %83 = arith.addf %82, %60 : vector<1x32xf32>
    %84 = arith.mulf %72, %83 : vector<1x32xf32>
    %85 = arith.addf %81, %84 : vector<1x32xf32>
    %86 = math.tanh %85 : vector<1x32xf32>
    %cst_67 = arith.constant 1.000000e+00 : f32
    %87 = vector.broadcast %cst_67 : f32 to vector<1x32xf32>
    %88 = arith.subf %87, %80 : vector<1x32xf32>
    %89 = arith.mulf %88, %86 : vector<1x32xf32>
    %90 = arith.mulf %80, %61 : vector<1x32xf32>
    %91 = arith.addf %89, %90 : vector<1x32xf32>
    %c1_i32 = arith.constant 1 : i32
    %92 = arith.index_cast %c1_i32 : i32 to index
    %c0_68 = arith.constant 0 : index
    %93 = vector.load %arg13[%92, %c0_68] : memref<8x96xf32, #tpu.memory_space<vmem>>, vector<1x96xf32>
    %cst_69 = arith.constant dense<0.000000e+00> : vector<1x96xf32>
    %94 = tpu.matmul %91, %59, %cst_69 {dimension_numbers = #tpu.dot_dimension_numbers<[1], [0], [0], [1], [0, 0, 1, 1], [], []>} : vector<1x32xf32>, vector<32x96xf32>, vector<1x96xf32> -> vector<1x96xf32>
    %95 = vector.extract_strided_slice %93 {offsets = [0, 0], sizes = [1, 32], strides = [1, 1]} : vector<1x96xf32> to vector<1x32xf32>
    %96 = vector.extract_strided_slice %94 {offsets = [0, 0], sizes = [1, 32], strides = [1, 1]} : vector<1x96xf32> to vector<1x32xf32>
    %97 = arith.addf %95, %96 : vector<1x32xf32>
    %98 = arith.negf %97 : vector<1x32xf32>
    %99 = math.exp %98 : vector<1x32xf32>
    %cst_70 = arith.constant 1.000000e+00 : f32
    %100 = vector.broadcast %cst_70 : f32 to vector<1x32xf32>
    %101 = arith.addf %100, %99 : vector<1x32xf32>
    %102 = arith.divf %100, %101 : vector<1x32xf32>
    %103 = vector.extract_strided_slice %93 {offsets = [0, 32], sizes = [1, 32], strides = [1, 1]} : vector<1x96xf32> to vector<1x32xf32>
    %104 = vector.extract_strided_slice %94 {offsets = [0, 32], sizes = [1, 32], strides = [1, 1]} : vector<1x96xf32> to vector<1x32xf32>
    %105 = arith.addf %103, %104 : vector<1x32xf32>
    %106 = arith.negf %105 : vector<1x32xf32>
    %107 = math.exp %106 : vector<1x32xf32>
    %cst_71 = arith.constant 1.000000e+00 : f32
    %108 = vector.broadcast %cst_71 : f32 to vector<1x32xf32>
    %109 = arith.addf %108, %107 : vector<1x32xf32>
    %110 = arith.divf %108, %109 : vector<1x32xf32>
    %111 = vector.extract_strided_slice %93 {offsets = [0, 64], sizes = [1, 32], strides = [1, 1]} : vector<1x96xf32> to vector<1x32xf32>
    %112 = vector.extract_strided_slice %94 {offsets = [0, 64], sizes = [1, 32], strides = [1, 1]} : vector<1x96xf32> to vector<1x32xf32>
    %113 = arith.addf %112, %60 : vector<1x32xf32>
    %114 = arith.mulf %102, %113 : vector<1x32xf32>
    %115 = arith.addf %111, %114 : vector<1x32xf32>
    %116 = math.tanh %115 : vector<1x32xf32>
    %cst_72 = arith.constant 1.000000e+00 : f32
    %117 = vector.broadcast %cst_72 : f32 to vector<1x32xf32>
    %118 = arith.subf %117, %110 : vector<1x32xf32>
    %119 = arith.mulf %118, %116 : vector<1x32xf32>
    %120 = arith.mulf %110, %91 : vector<1x32xf32>
    %121 = arith.addf %119, %120 : vector<1x32xf32>
    %c2_i32 = arith.constant 2 : i32
    %122 = arith.index_cast %c2_i32 : i32 to index
    %c0_73 = arith.constant 0 : index
    %123 = vector.load %arg13[%122, %c0_73] : memref<8x96xf32, #tpu.memory_space<vmem>>, vector<1x96xf32>
    %cst_74 = arith.constant dense<0.000000e+00> : vector<1x96xf32>
    %124 = tpu.matmul %121, %59, %cst_74 {dimension_numbers = #tpu.dot_dimension_numbers<[1], [0], [0], [1], [0, 0, 1, 1], [], []>} : vector<1x32xf32>, vector<32x96xf32>, vector<1x96xf32> -> vector<1x96xf32>
    %125 = vector.extract_strided_slice %123 {offsets = [0, 0], sizes = [1, 32], strides = [1, 1]} : vector<1x96xf32> to vector<1x32xf32>
    %126 = vector.extract_strided_slice %124 {offsets = [0, 0], sizes = [1, 32], strides = [1, 1]} : vector<1x96xf32> to vector<1x32xf32>
    %127 = arith.addf %125, %126 : vector<1x32xf32>
    %128 = arith.negf %127 : vector<1x32xf32>
    %129 = math.exp %128 : vector<1x32xf32>
    %cst_75 = arith.constant 1.000000e+00 : f32
    %130 = vector.broadcast %cst_75 : f32 to vector<1x32xf32>
    %131 = arith.addf %130, %129 : vector<1x32xf32>
    %132 = arith.divf %130, %131 : vector<1x32xf32>
    %133 = vector.extract_strided_slice %123 {offsets = [0, 32], sizes = [1, 32], strides = [1, 1]} : vector<1x96xf32> to vector<1x32xf32>
    %134 = vector.extract_strided_slice %124 {offsets = [0, 32], sizes = [1, 32], strides = [1, 1]} : vector<1x96xf32> to vector<1x32xf32>
    %135 = arith.addf %133, %134 : vector<1x32xf32>
    %136 = arith.negf %135 : vector<1x32xf32>
    %137 = math.exp %136 : vector<1x32xf32>
    %cst_76 = arith.constant 1.000000e+00 : f32
    %138 = vector.broadcast %cst_76 : f32 to vector<1x32xf32>
    %139 = arith.addf %138, %137 : vector<1x32xf32>
    %140 = arith.divf %138, %139 : vector<1x32xf32>
    %141 = vector.extract_strided_slice %123 {offsets = [0, 64], sizes = [1, 32], strides = [1, 1]} : vector<1x96xf32> to vector<1x32xf32>
    %142 = vector.extract_strided_slice %124 {offsets = [0, 64], sizes = [1, 32], strides = [1, 1]} : vector<1x96xf32> to vector<1x32xf32>
    %143 = arith.addf %142, %60 : vector<1x32xf32>
    %144 = arith.mulf %132, %143 : vector<1x32xf32>
    %145 = arith.addf %141, %144 : vector<1x32xf32>
    %146 = math.tanh %145 : vector<1x32xf32>
    %cst_77 = arith.constant 1.000000e+00 : f32
    %147 = vector.broadcast %cst_77 : f32 to vector<1x32xf32>
    %148 = arith.subf %147, %140 : vector<1x32xf32>
    %149 = arith.mulf %148, %146 : vector<1x32xf32>
    %150 = arith.mulf %140, %121 : vector<1x32xf32>
    %151 = arith.addf %149, %150 : vector<1x32xf32>
    %c3_i32 = arith.constant 3 : i32
    %152 = arith.index_cast %c3_i32 : i32 to index
    %c0_78 = arith.constant 0 : index
    %153 = vector.load %arg13[%152, %c0_78] : memref<8x96xf32, #tpu.memory_space<vmem>>, vector<1x96xf32>
    %cst_79 = arith.constant dense<0.000000e+00> : vector<1x96xf32>
    %154 = tpu.matmul %151, %59, %cst_79 {dimension_numbers = #tpu.dot_dimension_numbers<[1], [0], [0], [1], [0, 0, 1, 1], [], []>} : vector<1x32xf32>, vector<32x96xf32>, vector<1x96xf32> -> vector<1x96xf32>
    %155 = vector.extract_strided_slice %153 {offsets = [0, 0], sizes = [1, 32], strides = [1, 1]} : vector<1x96xf32> to vector<1x32xf32>
    %156 = vector.extract_strided_slice %154 {offsets = [0, 0], sizes = [1, 32], strides = [1, 1]} : vector<1x96xf32> to vector<1x32xf32>
    %157 = arith.addf %155, %156 : vector<1x32xf32>
    %158 = arith.negf %157 : vector<1x32xf32>
    %159 = math.exp %158 : vector<1x32xf32>
    %cst_80 = arith.constant 1.000000e+00 : f32
    %160 = vector.broadcast %cst_80 : f32 to vector<1x32xf32>
    %161 = arith.addf %160, %159 : vector<1x32xf32>
    %162 = arith.divf %160, %161 : vector<1x32xf32>
    %163 = vector.extract_strided_slice %153 {offsets = [0, 32], sizes = [1, 32], strides = [1, 1]} : vector<1x96xf32> to vector<1x32xf32>
    %164 = vector.extract_strided_slice %154 {offsets = [0, 32], sizes = [1, 32], strides = [1, 1]} : vector<1x96xf32> to vector<1x32xf32>
    %165 = arith.addf %163, %164 : vector<1x32xf32>
    %166 = arith.negf %165 : vector<1x32xf32>
    %167 = math.exp %166 : vector<1x32xf32>
    %cst_81 = arith.constant 1.000000e+00 : f32
    %168 = vector.broadcast %cst_81 : f32 to vector<1x32xf32>
    %169 = arith.addf %168, %167 : vector<1x32xf32>
    %170 = arith.divf %168, %169 : vector<1x32xf32>
    %171 = vector.extract_strided_slice %153 {offsets = [0, 64], sizes = [1, 32], strides = [1, 1]} : vector<1x96xf32> to vector<1x32xf32>
    %172 = vector.extract_strided_slice %154 {offsets = [0, 64], sizes = [1, 32], strides = [1, 1]} : vector<1x96xf32> to vector<1x32xf32>
    %173 = arith.addf %172, %60 : vector<1x32xf32>
    %174 = arith.mulf %162, %173 : vector<1x32xf32>
    %175 = arith.addf %171, %174 : vector<1x32xf32>
    %176 = math.tanh %175 : vector<1x32xf32>
    %cst_82 = arith.constant 1.000000e+00 : f32
    %177 = vector.broadcast %cst_82 : f32 to vector<1x32xf32>
    %178 = arith.subf %177, %170 : vector<1x32xf32>
    %179 = arith.mulf %178, %176 : vector<1x32xf32>
    %180 = arith.mulf %170, %151 : vector<1x32xf32>
    %181 = arith.addf %179, %180 : vector<1x32xf32>
    %c4_i32 = arith.constant 4 : i32
    %182 = arith.index_cast %c4_i32 : i32 to index
    %c0_83 = arith.constant 0 : index
    %183 = vector.load %arg13[%182, %c0_83] : memref<8x96xf32, #tpu.memory_space<vmem>>, vector<1x96xf32>
    %cst_84 = arith.constant dense<0.000000e+00> : vector<1x96xf32>
    %184 = tpu.matmul %181, %59, %cst_84 {dimension_numbers = #tpu.dot_dimension_numbers<[1], [0], [0], [1], [0, 0, 1, 1], [], []>} : vector<1x32xf32>, vector<32x96xf32>, vector<1x96xf32> -> vector<1x96xf32>
    %185 = vector.extract_strided_slice %183 {offsets = [0, 0], sizes = [1, 32], strides = [1, 1]} : vector<1x96xf32> to vector<1x32xf32>
    %186 = vector.extract_strided_slice %184 {offsets = [0, 0], sizes = [1, 32], strides = [1, 1]} : vector<1x96xf32> to vector<1x32xf32>
    %187 = arith.addf %185, %186 : vector<1x32xf32>
    %188 = arith.negf %187 : vector<1x32xf32>
    %189 = math.exp %188 : vector<1x32xf32>
    %cst_85 = arith.constant 1.000000e+00 : f32
    %190 = vector.broadcast %cst_85 : f32 to vector<1x32xf32>
    %191 = arith.addf %190, %189 : vector<1x32xf32>
    %192 = arith.divf %190, %191 : vector<1x32xf32>
    %193 = vector.extract_strided_slice %183 {offsets = [0, 32], sizes = [1, 32], strides = [1, 1]} : vector<1x96xf32> to vector<1x32xf32>
    %194 = vector.extract_strided_slice %184 {offsets = [0, 32], sizes = [1, 32], strides = [1, 1]} : vector<1x96xf32> to vector<1x32xf32>
    %195 = arith.addf %193, %194 : vector<1x32xf32>
    %196 = arith.negf %195 : vector<1x32xf32>
    %197 = math.exp %196 : vector<1x32xf32>
    %cst_86 = arith.constant 1.000000e+00 : f32
    %198 = vector.broadcast %cst_86 : f32 to vector<1x32xf32>
    %199 = arith.addf %198, %197 : vector<1x32xf32>
    %200 = arith.divf %198, %199 : vector<1x32xf32>
    %201 = vector.extract_strided_slice %183 {offsets = [0, 64], sizes = [1, 32], strides = [1, 1]} : vector<1x96xf32> to vector<1x32xf32>
    %202 = vector.extract_strided_slice %184 {offsets = [0, 64], sizes = [1, 32], strides = [1, 1]} : vector<1x96xf32> to vector<1x32xf32>
    %203 = arith.addf %202, %60 : vector<1x32xf32>
    %204 = arith.mulf %192, %203 : vector<1x32xf32>
    %205 = arith.addf %201, %204 : vector<1x32xf32>
    %206 = math.tanh %205 : vector<1x32xf32>
    %cst_87 = arith.constant 1.000000e+00 : f32
    %207 = vector.broadcast %cst_87 : f32 to vector<1x32xf32>
    %208 = arith.subf %207, %200 : vector<1x32xf32>
    %209 = arith.mulf %208, %206 : vector<1x32xf32>
    %210 = arith.mulf %200, %181 : vector<1x32xf32>
    %211 = arith.addf %209, %210 : vector<1x32xf32>
    %c5_i32 = arith.constant 5 : i32
    %212 = arith.index_cast %c5_i32 : i32 to index
    %c0_88 = arith.constant 0 : index
    %213 = vector.load %arg13[%212, %c0_88] : memref<8x96xf32, #tpu.memory_space<vmem>>, vector<1x96xf32>
    %cst_89 = arith.constant dense<0.000000e+00> : vector<1x96xf32>
    %214 = tpu.matmul %211, %59, %cst_89 {dimension_numbers = #tpu.dot_dimension_numbers<[1], [0], [0], [1], [0, 0, 1, 1], [], []>} : vector<1x32xf32>, vector<32x96xf32>, vector<1x96xf32> -> vector<1x96xf32>
    %215 = vector.extract_strided_slice %213 {offsets = [0, 0], sizes = [1, 32], strides = [1, 1]} : vector<1x96xf32> to vector<1x32xf32>
    %216 = vector.extract_strided_slice %214 {offsets = [0, 0], sizes = [1, 32], strides = [1, 1]} : vector<1x96xf32> to vector<1x32xf32>
    %217 = arith.addf %215, %216 : vector<1x32xf32>
    %218 = arith.negf %217 : vector<1x32xf32>
    %219 = math.exp %218 : vector<1x32xf32>
    %cst_90 = arith.constant 1.000000e+00 : f32
    %220 = vector.broadcast %cst_90 : f32 to vector<1x32xf32>
    %221 = arith.addf %220, %219 : vector<1x32xf32>
    %222 = arith.divf %220, %221 : vector<1x32xf32>
    %223 = vector.extract_strided_slice %213 {offsets = [0, 32], sizes = [1, 32], strides = [1, 1]} : vector<1x96xf32> to vector<1x32xf32>
    %224 = vector.extract_strided_slice %214 {offsets = [0, 32], sizes = [1, 32], strides = [1, 1]} : vector<1x96xf32> to vector<1x32xf32>
    %225 = arith.addf %223, %224 : vector<1x32xf32>
    %226 = arith.negf %225 : vector<1x32xf32>
    %227 = math.exp %226 : vector<1x32xf32>
    %cst_91 = arith.constant 1.000000e+00 : f32
    %228 = vector.broadcast %cst_91 : f32 to vector<1x32xf32>
    %229 = arith.addf %228, %227 : vector<1x32xf32>
    %230 = arith.divf %228, %229 : vector<1x32xf32>
    %231 = vector.extract_strided_slice %213 {offsets = [0, 64], sizes = [1, 32], strides = [1, 1]} : vector<1x96xf32> to vector<1x32xf32>
    %232 = vector.extract_strided_slice %214 {offsets = [0, 64], sizes = [1, 32], strides = [1, 1]} : vector<1x96xf32> to vector<1x32xf32>
    %233 = arith.addf %232, %60 : vector<1x32xf32>
    %234 = arith.mulf %222, %233 : vector<1x32xf32>
    %235 = arith.addf %231, %234 : vector<1x32xf32>
    %236 = math.tanh %235 : vector<1x32xf32>
    %cst_92 = arith.constant 1.000000e+00 : f32
    %237 = vector.broadcast %cst_92 : f32 to vector<1x32xf32>
    %238 = arith.subf %237, %230 : vector<1x32xf32>
    %239 = arith.mulf %238, %236 : vector<1x32xf32>
    %240 = arith.mulf %230, %211 : vector<1x32xf32>
    %241 = arith.addf %239, %240 : vector<1x32xf32>
    %c6_i32 = arith.constant 6 : i32
    %242 = arith.index_cast %c6_i32 : i32 to index
    %c0_93 = arith.constant 0 : index
    %243 = vector.load %arg13[%242, %c0_93] : memref<8x96xf32, #tpu.memory_space<vmem>>, vector<1x96xf32>
    %cst_94 = arith.constant dense<0.000000e+00> : vector<1x96xf32>
    %244 = tpu.matmul %241, %59, %cst_94 {dimension_numbers = #tpu.dot_dimension_numbers<[1], [0], [0], [1], [0, 0, 1, 1], [], []>} : vector<1x32xf32>, vector<32x96xf32>, vector<1x96xf32> -> vector<1x96xf32>
    %245 = vector.extract_strided_slice %243 {offsets = [0, 0], sizes = [1, 32], strides = [1, 1]} : vector<1x96xf32> to vector<1x32xf32>
    %246 = vector.extract_strided_slice %244 {offsets = [0, 0], sizes = [1, 32], strides = [1, 1]} : vector<1x96xf32> to vector<1x32xf32>
    %247 = arith.addf %245, %246 : vector<1x32xf32>
    %248 = arith.negf %247 : vector<1x32xf32>
    %249 = math.exp %248 : vector<1x32xf32>
    %cst_95 = arith.constant 1.000000e+00 : f32
    %250 = vector.broadcast %cst_95 : f32 to vector<1x32xf32>
    %251 = arith.addf %250, %249 : vector<1x32xf32>
    %252 = arith.divf %250, %251 : vector<1x32xf32>
    %253 = vector.extract_strided_slice %243 {offsets = [0, 32], sizes = [1, 32], strides = [1, 1]} : vector<1x96xf32> to vector<1x32xf32>
    %254 = vector.extract_strided_slice %244 {offsets = [0, 32], sizes = [1, 32], strides = [1, 1]} : vector<1x96xf32> to vector<1x32xf32>
    %255 = arith.addf %253, %254 : vector<1x32xf32>
    %256 = arith.negf %255 : vector<1x32xf32>
    %257 = math.exp %256 : vector<1x32xf32>
    %cst_96 = arith.constant 1.000000e+00 : f32
    %258 = vector.broadcast %cst_96 : f32 to vector<1x32xf32>
    %259 = arith.addf %258, %257 : vector<1x32xf32>
    %260 = arith.divf %258, %259 : vector<1x32xf32>
    %261 = vector.extract_strided_slice %243 {offsets = [0, 64], sizes = [1, 32], strides = [1, 1]} : vector<1x96xf32> to vector<1x32xf32>
    %262 = vector.extract_strided_slice %244 {offsets = [0, 64], sizes = [1, 32], strides = [1, 1]} : vector<1x96xf32> to vector<1x32xf32>
    %263 = arith.addf %262, %60 : vector<1x32xf32>
    %264 = arith.mulf %252, %263 : vector<1x32xf32>
    %265 = arith.addf %261, %264 : vector<1x32xf32>
    %266 = math.tanh %265 : vector<1x32xf32>
    %cst_97 = arith.constant 1.000000e+00 : f32
    %267 = vector.broadcast %cst_97 : f32 to vector<1x32xf32>
    %268 = arith.subf %267, %260 : vector<1x32xf32>
    %269 = arith.mulf %268, %266 : vector<1x32xf32>
    %270 = arith.mulf %260, %241 : vector<1x32xf32>
    %271 = arith.addf %269, %270 : vector<1x32xf32>
    %c7_i32 = arith.constant 7 : i32
    %272 = arith.index_cast %c7_i32 : i32 to index
    %c0_98 = arith.constant 0 : index
    %273 = vector.load %arg13[%272, %c0_98] : memref<8x96xf32, #tpu.memory_space<vmem>>, vector<1x96xf32>
    %cst_99 = arith.constant dense<0.000000e+00> : vector<1x96xf32>
    %274 = tpu.matmul %271, %59, %cst_99 {dimension_numbers = #tpu.dot_dimension_numbers<[1], [0], [0], [1], [0, 0, 1, 1], [], []>} : vector<1x32xf32>, vector<32x96xf32>, vector<1x96xf32> -> vector<1x96xf32>
    %275 = vector.extract_strided_slice %273 {offsets = [0, 0], sizes = [1, 32], strides = [1, 1]} : vector<1x96xf32> to vector<1x32xf32>
    %276 = vector.extract_strided_slice %274 {offsets = [0, 0], sizes = [1, 32], strides = [1, 1]} : vector<1x96xf32> to vector<1x32xf32>
    %277 = arith.addf %275, %276 : vector<1x32xf32>
    %278 = arith.negf %277 : vector<1x32xf32>
    %279 = math.exp %278 : vector<1x32xf32>
    %cst_100 = arith.constant 1.000000e+00 : f32
    %280 = vector.broadcast %cst_100 : f32 to vector<1x32xf32>
    %281 = arith.addf %280, %279 : vector<1x32xf32>
    %282 = arith.divf %280, %281 : vector<1x32xf32>
    %283 = vector.extract_strided_slice %273 {offsets = [0, 32], sizes = [1, 32], strides = [1, 1]} : vector<1x96xf32> to vector<1x32xf32>
    %284 = vector.extract_strided_slice %274 {offsets = [0, 32], sizes = [1, 32], strides = [1, 1]} : vector<1x96xf32> to vector<1x32xf32>
    %285 = arith.addf %283, %284 : vector<1x32xf32>
    %286 = arith.negf %285 : vector<1x32xf32>
    %287 = math.exp %286 : vector<1x32xf32>
    %cst_101 = arith.constant 1.000000e+00 : f32
    %288 = vector.broadcast %cst_101 : f32 to vector<1x32xf32>
    %289 = arith.addf %288, %287 : vector<1x32xf32>
    %290 = arith.divf %288, %289 : vector<1x32xf32>
    %291 = vector.extract_strided_slice %273 {offsets = [0, 64], sizes = [1, 32], strides = [1, 1]} : vector<1x96xf32> to vector<1x32xf32>
    %292 = vector.extract_strided_slice %274 {offsets = [0, 64], sizes = [1, 32], strides = [1, 1]} : vector<1x96xf32> to vector<1x32xf32>
    %293 = arith.addf %292, %60 : vector<1x32xf32>
    %294 = arith.mulf %282, %293 : vector<1x32xf32>
    %295 = arith.addf %291, %294 : vector<1x32xf32>
    %296 = math.tanh %295 : vector<1x32xf32>
    %cst_102 = arith.constant 1.000000e+00 : f32
    %297 = vector.broadcast %cst_102 : f32 to vector<1x32xf32>
    %298 = arith.subf %297, %290 : vector<1x32xf32>
    %299 = arith.mulf %298, %296 : vector<1x32xf32>
    %300 = arith.mulf %290, %271 : vector<1x32xf32>
    %301 = arith.addf %299, %300 : vector<1x32xf32>
    %c8_i32 = arith.constant 8 : i32
    %c1_103 = arith.constant 1 : index
    %c0_104 = arith.constant 0 : index
    %c0_105 = arith.constant 0 : index
    %302 = vector.load %arg7[%c1_103, %c0_104, %c0_105] : memref<2x2x96xf32, #tpu.memory_space<vmem>>, vector<1x2x96xf32>
    %303 = vector.shape_cast %302 : vector<1x2x96xf32> to vector<2x96xf32>
    %304 = vector.extract_strided_slice %48 {offsets = [7, 0], sizes = [1, 32], strides = [1, 1]} : vector<8x32xf32> to vector<1x32xf32>
    %c1_106 = arith.constant 1 : index
    %c0_107 = arith.constant 0 : index
    %c0_108 = arith.constant 0 : index
    %305 = vector.load %arg5[%c1_106, %c0_107, %c0_108] : memref<2x32x96xf32, #tpu.memory_space<vmem>>, vector<1x32x96xf32>
    %306 = vector.shape_cast %305 : vector<1x32x96xf32> to vector<32x96xf32>
    %cst_109 = arith.constant dense<0.000000e+00> : vector<1x96xf32>
    %307 = tpu.matmul %304, %306, %cst_109 {dimension_numbers = #tpu.dot_dimension_numbers<[1], [0], [0], [1], [0, 0, 1, 1], [], []>} : vector<1x32xf32>, vector<32x96xf32>, vector<1x96xf32> -> vector<1x96xf32>
    %308 = vector.extract_strided_slice %303 {offsets = [0, 0], sizes = [1, 96], strides = [1, 1]} : vector<2x96xf32> to vector<1x96xf32>
    %309 = arith.addf %307, %308 : vector<1x96xf32>
    %310 = vector.extract_strided_slice %309 {offsets = [0, 0], sizes = [1, 32], strides = [1, 1]} : vector<1x96xf32> to vector<1x32xf32>
    %311 = arith.negf %310 : vector<1x32xf32>
    %312 = math.exp %311 : vector<1x32xf32>
    %cst_110 = arith.constant 1.000000e+00 : f32
    %313 = vector.broadcast %cst_110 : f32 to vector<1x32xf32>
    %314 = arith.addf %313, %312 : vector<1x32xf32>
    %315 = arith.divf %313, %314 : vector<1x32xf32>
    %316 = vector.extract_strided_slice %309 {offsets = [0, 32], sizes = [1, 32], strides = [1, 1]} : vector<1x96xf32> to vector<1x32xf32>
    %317 = arith.negf %316 : vector<1x32xf32>
    %318 = math.exp %317 : vector<1x32xf32>
    %cst_111 = arith.constant 1.000000e+00 : f32
    %319 = vector.broadcast %cst_111 : f32 to vector<1x32xf32>
    %320 = arith.addf %319, %318 : vector<1x32xf32>
    %321 = arith.divf %319, %320 : vector<1x32xf32>
    %322 = vector.extract_strided_slice %309 {offsets = [0, 64], sizes = [1, 32], strides = [1, 1]} : vector<1x96xf32> to vector<1x32xf32>
    %323 = vector.extract_strided_slice %303 {offsets = [1, 64], sizes = [1, 32], strides = [1, 1]} : vector<2x96xf32> to vector<1x32xf32>
    %324 = arith.mulf %315, %323 : vector<1x32xf32>
    %325 = arith.addf %322, %324 : vector<1x32xf32>
    %326 = math.tanh %325 : vector<1x32xf32>
    %cst_112 = arith.constant 1.000000e+00 : f32
    %327 = vector.broadcast %cst_112 : f32 to vector<1x32xf32>
    %328 = arith.subf %327, %321 : vector<1x32xf32>
    %329 = arith.mulf %328, %326 : vector<1x32xf32>
    %c0_113 = arith.constant 0 : index
    %c0_114 = arith.constant 0 : index
    %330 = vector.load %arg8[%c0_113, %c0_114] : memref<64x16xf32, #tpu.memory_space<vmem>>, vector<32x16xf32>
    %cst_115 = arith.constant dense<0.000000e+00> : vector<1x16xf32>
    %331 = tpu.matmul %301, %330, %cst_115 {dimension_numbers = #tpu.dot_dimension_numbers<[1], [0], [0], [1], [0, 0, 1, 1], [], []>} : vector<1x32xf32>, vector<32x16xf32>, vector<1x16xf32> -> vector<1x16xf32>
    %c32 = arith.constant 32 : index
    %c0_116 = arith.constant 0 : index
    %332 = vector.load %arg8[%c32, %c0_116] : memref<64x16xf32, #tpu.memory_space<vmem>>, vector<32x16xf32>
    %cst_117 = arith.constant dense<0.000000e+00> : vector<1x16xf32>
    %333 = tpu.matmul %329, %332, %cst_117 {dimension_numbers = #tpu.dot_dimension_numbers<[1], [0], [0], [1], [0, 0, 1, 1], [], []>} : vector<1x32xf32>, vector<32x16xf32>, vector<1x16xf32> -> vector<1x16xf32>
    %334 = arith.addf %331, %333 : vector<1x16xf32>
    %c0_118 = arith.constant 0 : index
    %c0_119 = arith.constant 0 : index
    %335 = vector.load %arg9[%c0_118, %c0_119] : memref<1x16xf32, #tpu.memory_space<vmem>>, vector<1x16xf32>
    %336 = arith.addf %334, %335 : vector<1x16xf32>
    %c0_120 = arith.constant 0 : index
    %c0_121 = arith.constant 0 : index
    %c0_122 = arith.constant 0 : index
    %337 = vector.load %arg10[%c0_120, %c0_121, %c0_122] : memref<1x1x16xf32, #tpu.memory_space<vmem>>, vector<1x1x16xf32>
    %338 = vector.shape_cast %337 : vector<1x1x16xf32> to vector<1x16xf32>
    %339 = vector.shape_cast %336 : vector<1x16xf32> to vector<1x1x16xf32>
    tpu.vector_store %arg10[%c0_120, %c0_121, %c0_122], %339 {strides = array<i32>} : memref<1x1x16xf32, #tpu.memory_space<vmem>>, vector<1x1x16xf32>,
    return
  }
  func.func @transform_0(%arg0: i32) -> (i32, i32, i32) {
    %c0_i32 = arith.constant 0 : i32
    %c0_i32_0 = arith.constant 0 : i32
    %c0_i32_1 = arith.constant 0 : i32
    return %arg0, %c0_i32, %c0_i32_0 : i32, i32, i32
  }
  func.func @transform_1(%arg0: i32) -> (i32, i32, i32) {
    %c0_i32 = arith.constant 0 : i32
    %c0_i32_0 = arith.constant 0 : i32
    %c0_i32_1 = arith.constant 0 : i32
    %c0_i32_2 = arith.constant 0 : i32
    return %c0_i32, %c0_i32_0, %c0_i32_1 : i32, i32, i32
  }
  func.func @transform_2(%arg0: i32) -> (i32, i32, i32) {
    %c0_i32 = arith.constant 0 : i32
    %c0_i32_0 = arith.constant 0 : i32
    %c0_i32_1 = arith.constant 0 : i32
    %c0_i32_2 = arith.constant 0 : i32
    return %c0_i32, %c0_i32_0, %c0_i32_1 : i32, i32, i32
  }
  func.func @transform_3(%arg0: i32) -> (i32, i32) {
    %c0_i32 = arith.constant 0 : i32
    %c0_i32_0 = arith.constant 0 : i32
    %c0_i32_1 = arith.constant 0 : i32
    return %c0_i32, %c0_i32_0 : i32, i32
  }
  func.func @transform_4(%arg0: i32) -> (i32, i32, i32) {
    %c0_i32 = arith.constant 0 : i32
    %c0_i32_0 = arith.constant 0 : i32
    %c0_i32_1 = arith.constant 0 : i32
    %c0_i32_2 = arith.constant 0 : i32
    return %c0_i32, %c0_i32_0, %c0_i32_1 : i32, i32, i32
  }
  func.func @transform_5(%arg0: i32) -> (i32, i32, i32) {
    %c0_i32 = arith.constant 0 : i32
    %c0_i32_0 = arith.constant 0 : i32
    %c0_i32_1 = arith.constant 0 : i32
    %c0_i32_2 = arith.constant 0 : i32
    return %c0_i32, %c0_i32_0, %c0_i32_1 : i32, i32, i32
  }
  func.func @transform_6(%arg0: i32) -> (i32, i32, i32) {
    %c0_i32 = arith.constant 0 : i32
    %c0_i32_0 = arith.constant 0 : i32
    %c0_i32_1 = arith.constant 0 : i32
    %c0_i32_2 = arith.constant 0 : i32
    return %c0_i32, %c0_i32_0, %c0_i32_1 : i32, i32, i32
  }
  func.func @transform_7(%arg0: i32) -> (i32, i32) {
    %c0_i32 = arith.constant 0 : i32
    %c0_i32_0 = arith.constant 0 : i32
    %c0_i32_1 = arith.constant 0 : i32
    return %c0_i32, %c0_i32_0 : i32, i32
  }
  func.func @transform_8(%arg0: i32) -> (i32, i32) {
    %c0_i32 = arith.constant 0 : i32
    %c0_i32_0 = arith.constant 0 : i32
    %c0_i32_1 = arith.constant 0 : i32
    return %c0_i32, %c0_i32_0 : i32, i32
  }
  func.func @transform_9(%arg0: i32) -> (i32, i32, i32) {
    %c0_i32 = arith.constant 0 : i32
    %c0_i32_0 = arith.constant 0 : i32
    %c0_i32_1 = arith.constant 0 : i32
    return %arg0, %c0_i32, %c0_i32_0 : i32, i32, i32
  }
}

</mosaic_0001>

<llo_original>
// kernel: tpu_custom_call.1
$region0: #{tpu_custom_call.1}
  #allocation0 [shape = 'u32[]', space=smem, size = 0x4, offset = 0x4, fixed_abs, tag = 'smem constant byte address 0x4 - core index']
  #allocation1 [shape = 'u32[72,128]{1,0:T(1,128)}', space=vmem, size = 0x9000, scoped, tag = 'internal scratch']
  #allocation2 [shape = 'f32[10,16]{1,0:T(8,128)}', space=vmem, size = 0x2000, scoped, tag = 'scratch operand']
  #allocation3 [shape = 'f32[10,32]{1,0:T(8,128)}', space=vmem, size = 0x2000, scoped, tag = 'scratch operand']
  #allocation4 [shape = 'f32[8,96]{1,0:T(8,128)}', space=vmem, size = 0x1000, scoped, tag = 'scratch operand']
  %s0 = inlined_call_operand.vmem [shape: f32[2,8,16], index: 0, kind: input, shape index: {}]
  %s1 = inlined_call_operand.hbm [shape: f32[3,16,32], index: 1, kind: input, shape index: {}]
  %s2 = inlined_call_operand.hbm [shape: f32[3,32,32], index: 2, kind: input, shape index: {}]
  %s3 = inlined_call_operand.hbm [shape: f32[2,32], index: 3, kind: input, shape index: {}]
  %s4 = inlined_call_operand.vmem [shape: f32[2,32,96], index: 4, kind: input, shape index: {}]
  %s5 = inlined_call_operand.hbm [shape: f32[2,32,96], index: 5, kind: input, shape index: {}]
  %s6 = inlined_call_operand.vmem [shape: f32[2,2,96], index: 6, kind: input, shape index: {}]
  %s7 = inlined_call_operand.vmem [shape: f32[64,16], index: 7, kind: input, shape index: {}]
  %s8 = inlined_call_operand.vmem [shape: f32[1,16], index: 8, kind: input, shape index: {}]
  %s9 = inlined_call_operand.hbm [shape: f32[2,1,16], index: 9, kind: output, shape index: {}]
  %s10 = sld [smem:[#allocation0]]
  $region85: #{tpu_custom_call.1} parent=0
    _
  %s12 = ssub.s32 1, %s10
  %s13 = scalar_select 0, %s12, %s10
  $region1: #{tpu_custom_call.1} parent=0
    #allocation5 [shape = 'u8[24576]{0}', space=vmem, size = 0x6000, scoped, tag = 'input window, operand 1, single buffered']
    #allocation6 [shape = 's32[2]{0}', space=sflag, size = 0x8, scoped, tag = 'scoped memory for tpu_custom_call.1']
    #allocation7 [shape = 's32[2]{0}', space=sflag, size = 0x8, scoped, tag = 'scoped memory for tpu_custom_call.1']
    #allocation8 [shape = 'u8[49152]{0}', space=vmem, size = 0xc000, scoped, tag = 'input window, operand 2, single buffered']
    #allocation9 [shape = 's32[1]{0}', space=sflag, size = 0x4, scoped, tag = 'scoped memory for tpu_custom_call.1']
    #allocation10 [shape = 'u8[1024]{0}', space=vmem, size = 0x400, scoped, tag = 'input window, operand 3, single buffered']
    #allocation11 [shape = 'u8[32768]{0}', space=vmem, size = 0x8000, scoped, tag = 'input window, operand 5, single buffered']
    #allocation12 [shape = 's32[1]{0}', space=sflag, size = 0x4, scoped, tag = 'scoped memory for tpu_custom_call.1']
    #allocation13 [shape = 'u8[1024]{0}', space=vmem, size = 0x400, scoped, tag = 'output window, operand 0']
    %14 = vsyncpa [#allocation6], 0
    %15 = vsyncpa [#allocation9], 0
    %16 = vsyncpa [#allocation12], 0
    %17 = vsyncpa [#allocation7], 0
    %s18 = scalar_lea.sflag [#allocation7], 1
    %19 = vsyncpa %s18, 0
    loop: start=0, step=1, limit=4
    $region2: #{tpu_custom_call.1} parent=1 // loop_pre_header
      _
    $region3: #{tpu_custom_call.1} parent=1 // loop_header
      %s21 = sphi 0, %s25
      %p22 = scmp.ge.s32.totalorder %s21, 4
      %s31 = sphi 0, %s33
      %s34 = sphi 0, %s31
      %s35 = sphi 0, %s34
      %s51 = sphi 0, %s35
      %s55 = sphi 0, %s55
      %s57 = sphi 0, %s55
      %s58 = sphi 0, %s57
      %s72 = sphi 0, %s58
      %s76 = sphi 0, %s76
      %s78 = sphi 0, %s76
      %s79 = sphi 0, %s78
      %s93 = sphi 0, %s79
      %s97 = sphi 0, %s97
      %s99 = sphi 0, %s97
      %s100 = sphi 0, %s99
      %s114 = sphi 0, %s100
      %s118 = sphi 0, %s118
      %s120 = sphi 0, %s118
      %s121 = sphi 0, %s120
      %s135 = sphi 0, %s121
      %s139 = sphi 0, %s139
      %s141 = sphi 0, %s139
      %s142 = sphi 0, %s141
      %s156 = sphi 0, %s142
      %s160 = sphi 0, %s160
      %s162 = sphi 0, %s160
      %s163 = sphi 0, %s162
      %s177 = sphi 0, %s163
      %s181 = sphi 0, %s181
      %s183 = sphi 0, %s181
      %s184 = sphi 0, %s183
      %s198 = sphi 0, %s184
      %s202 = sphi 0, %s202
      %s204 = sphi 0, %s202
      %s205 = sphi 0, %s204
      %s219 = sphi 0, %s205
      %s225 = sphi 0, %s227
      %s228 = sphi 0, %s225
      %s229 = sphi 0, %s228
      %s245 = sphi 0, %s229
    $region4: #{tpu_custom_call.1} parent=1 // loop_header_branch
      %24 = sbr.rel (%p22) target = $region8
    $region5: #{tpu_custom_call.1} parent=1 // loop_body
      %s26 = ssub.s32 %s21, 1
      %s27 = ssub.s32 %s21, 2
      %s28 = sadd.s32 %s21, 1
      %s29 = ssub.s32 %s21, %s28
      %p30 = scmp.eq.s32.totalorder %s29, 0
      %s32 = sadd.s32 %s31, 1
      %s33 = scalar_select %p30, %s31, %s32
      %p36 = pneg %p30
      %p37 = scmp.eq.s32.totalorder %s21, 1
      %p38 = por %p36, %p37
      %p39 = scmp.ne.s32.totalorder %s31, %s34
      %p40 = scmp.eq.s32.totalorder %s21, 0
      %p41 = por %p39, %p40
      %p42 = scmp.ne.s32.totalorder %s31, %s34
      %p43 = scmp.eq.s32.totalorder %s26, 1
      %p44 = por %p42, %p43
      %p45 = scmp.ne.s32.totalorder %s34, %s35
      %p46 = scmp.eq.s32.totalorder %s26, 0
      %p47 = por %p45, %p46
      %p48 = scmp.ne.s32.totalorder %s34, %s35
      %p49 = scmp.eq.s32.totalorder %s27, 1
      %p50 = por %p48, %p49
      %p52 = scmp.ne.s32.totalorder %s35, %s51
      %p53 = scmp.eq.s32.totalorder %s27, 0
      %p54 = por %p52, %p53
      %s56 = sadd.s32 %s55, 1
      %p59 = scmp.eq.s32.totalorder %s21, 1
      %p60 = scmp.ne.s32.totalorder %s55, %s57
      %p61 = scmp.eq.s32.totalorder %s21, 0
      %p62 = por %p60, %p61
      %p63 = scmp.ne.s32.totalorder %s55, %s57
      %p64 = scmp.eq.s32.totalorder %s26, 1
      %p65 = por %p63, %p64
      %p66 = scmp.ne.s32.totalorder %s57, %s58
      %p67 = scmp.eq.s32.totalorder %s26, 0
      %p68 = por %p66, %p67
      %p69 = scmp.ne.s32.totalorder %s57, %s58
      %p70 = scmp.eq.s32.totalorder %s27, 1
      %p71 = por %p69, %p70
      %p73 = scmp.ne.s32.totalorder %s58, %s72
      %p74 = scmp.eq.s32.totalorder %s27, 0
      %p75 = por %p73, %p74
      %s77 = sadd.s32 %s76, 1
      %p80 = scmp.eq.s32.totalorder %s21, 1
      %p81 = scmp.ne.s32.totalorder %s76, %s78
      %p82 = scmp.eq.s32.totalorder %s21, 0
      %p83 = por %p81, %p82
      %p84 = scmp.ne.s32.totalorder %s76, %s78
      %p85 = scmp.eq.s32.totalorder %s26, 1
      %p86 = por %p84, %p85
      %p87 = scmp.ne.s32.totalorder %s78, %s79
      %p88 = scmp.eq.s32.totalorder %s26, 0
      %p89 = por %p87, %p88
      %p90 = scmp.ne.s32.totalorder %s78, %s79
      %p91 = scmp.eq.s32.totalorder %s27, 1
      %p92 = por %p90, %p91
      %p94 = scmp.ne.s32.totalorder %s79, %s93
      %p95 = scmp.eq.s32.totalorder %s27, 0
      %p96 = por %p94, %p95
      %s98 = sadd.s32 %s97, 1
      %p101 = scmp.eq.s32.totalorder %s21, 1
      %p102 = scmp.ne.s32.totalorder %s97, %s99
      %p103 = scmp.eq.s32.totalorder %s21, 0
      %p104 = por %p102, %p103
      %p105 = scmp.ne.s32.totalorder %s97, %s99
      %p106 = scmp.eq.s32.totalorder %s26, 1
      %p107 = por %p105, %p106
      %p108 = scmp.ne.s32.totalorder %s99, %s100
      %p109 = scmp.eq.s32.totalorder %s26, 0
      %p110 = por %p108, %p109
      %p111 = scmp.ne.s32.totalorder %s99, %s100
      %p112 = scmp.eq.s32.totalorder %s27, 1
      %p113 = por %p111, %p112
      %p115 = scmp.ne.s32.totalorder %s100, %s114
      %p116 = scmp.eq.s32.totalorder %s27, 0
      %p117 = por %p115, %p116
      %s119 = sadd.s32 %s118, 1
      %p122 = scmp.eq.s32.totalorder %s21, 1
      %p123 = scmp.ne.s32.totalorder %s118, %s120
      %p124 = scmp.eq.s32.totalorder %s21, 0
      %p125 = por %p123, %p124
      %p126 = scmp.ne.s32.totalorder %s118, %s120
      %p127 = scmp.eq.s32.totalorder %s26, 1
      %p128 = por %p126, %p127
      %p129 = scmp.ne.s32.totalorder %s120, %s121
      %p130 = scmp.eq.s32.totalorder %s26, 0
      %p131 = por %p129, %p130
      %p132 = scmp.ne.s32.totalorder %s120, %s121
      %p133 = scmp.eq.s32.totalorder %s27, 1
      %p134 = por %p132, %p133
      %p136 = scmp.ne.s32.totalorder %s121, %s135
      %p137 = scmp.eq.s32.totalorder %s27, 0
      %p138 = por %p136, %p137
      %s140 = sadd.s32 %s139, 1
      %p143 = scmp.eq.s32.totalorder %s21, 1
      %p144 = scmp.ne.s32.totalorder %s139, %s141
      %p145 = scmp.eq.s32.totalorder %s21, 0
      %p146 = por %p144, %p145
      %p147 = scmp.ne.s32.totalorder %s139, %s141
      %p148 = scmp.eq.s32.totalorder %s26, 1
      %p149 = por %p147, %p148
      %p150 = scmp.ne.s32.totalorder %s141, %s142
      %p151 = scmp.eq.s32.totalorder %s26, 0
      %p152 = por %p150, %p151
      %p153 = scmp.ne.s32.totalorder %s141, %s142
      %p154 = scmp.eq.s32.totalorder %s27, 1
      %p155 = por %p153, %p154
      %p157 = scmp.ne.s32.totalorder %s142, %s156
      %p158 = scmp.eq.s32.totalorder %s27, 0
      %p159 = por %p157, %p158
      %s161 = sadd.s32 %s160, 1
      %p164 = scmp.eq.s32.totalorder %s21, 1
      %p165 = scmp.ne.s32.totalorder %s160, %s162
      %p166 = scmp.eq.s32.totalorder %s21, 0
      %p167 = por %p165, %p166
      %p168 = scmp.ne.s32.totalorder %s160, %s162
      %p169 = scmp.eq.s32.totalorder %s26, 1
      %p170 = por %p168, %p169
      %p171 = scmp.ne.s32.totalorder %s162, %s163
      %p172 = scmp.eq.s32.totalorder %s26, 0
      %p173 = por %p171, %p172
      %p174 = scmp.ne.s32.totalorder %s162, %s163
      %p175 = scmp.eq.s32.totalorder %s27, 1
      %p176 = por %p174, %p175
      %p178 = scmp.ne.s32.totalorder %s163, %s177
      %p179 = scmp.eq.s32.totalorder %s27, 0
      %p180 = por %p178, %p179
      %s182 = sadd.s32 %s181, 1
      %p185 = scmp.eq.s32.totalorder %s21, 1
      %p186 = scmp.ne.s32.totalorder %s181, %s183
      %p187 = scmp.eq.s32.totalorder %s21, 0
      %p188 = por %p186, %p187
      %p189 = scmp.ne.s32.totalorder %s181, %s183
      %p190 = scmp.eq.s32.totalorder %s26, 1
      %p191 = por %p189, %p190
      %p192 = scmp.ne.s32.totalorder %s183, %s184
      %p193 = scmp.eq.s32.totalorder %s26, 0
      %p194 = por %p192, %p193
      %p195 = scmp.ne.s32.totalorder %s183, %s184
      %p196 = scmp.eq.s32.totalorder %s27, 1
      %p197 = por %p195, %p196
      %p199 = scmp.ne.s32.totalorder %s184, %s198
      %p200 = scmp.eq.s32.totalorder %s27, 0
      %p201 = por %p199, %p200
      %s203 = sadd.s32 %s202, 1
      %p206 = scmp.eq.s32.totalorder %s21, 1
      %p207 = scmp.ne.s32.totalorder %s202, %s204
      %p208 = scmp.eq.s32.totalorder %s21, 0
      %p209 = por %p207, %p208
      %p210 = scmp.ne.s32.totalorder %s202, %s204
      %p211 = scmp.eq.s32.totalorder %s26, 1
      %p212 = por %p210, %p211
      %p213 = scmp.ne.s32.totalorder %s204, %s205
      %p214 = scmp.eq.s32.totalorder %s26, 0
      %p215 = por %p213, %p214
      %p216 = scmp.ne.s32.totalorder %s204, %s205
      %p217 = scmp.eq.s32.totalorder %s27, 1
      %p218 = por %p216, %p217
      %p220 = scmp.ne.s32.totalorder %s205, %s219
      %p221 = scmp.eq.s32.totalorder %s27, 0
      %p222 = por %p220, %p221
      %s223 = ssub.s32 %s21, %s28
      %p224 = scmp.eq.s32.totalorder %s223, 0
      %s226 = sadd.s32 %s225, 1
      %s227 = scalar_select %p224, %s225, %s226
      %p230 = pneg %p224
      %p231 = scmp.eq.s32.totalorder %s21, 1
      %p232 = por %p230, %p231
      %p233 = scmp.ne.s32.totalorder %s225, %s228
      %p234 = scmp.eq.s32.totalorder %s21, 0
      %p235 = por %p233, %p234
      %p236 = scmp.ne.s32.totalorder %s225, %s228
      %p237 = scmp.eq.s32.totalorder %s26, 1
      %p238 = por %p236, %p237
      %p239 = scmp.ne.s32.totalorder %s228, %s229
      %p240 = scmp.eq.s32.totalorder %s26, 0
      %p241 = por %p239, %p240
      %p242 = scmp.ne.s32.totalorder %s228, %s229
      %p243 = scmp.eq.s32.totalorder %s27, 1
      %p244 = por %p242, %p243
      %p246 = scmp.ne.s32.totalorder %s229, %s245
      %p247 = scmp.eq.s32.totalorder %s27, 0
      %p248 = por %p246, %p247
      %p249 = scmp.le.s32.totalorder 1, %s21
      %p250 = scmp.lt.s32.totalorder %s21, 3
      %p251 = pnand %p249, %p250
      %p252 = pneg %p251
      // Predicated region
      $region9: #{tpu_custom_call.1} parent=5 // pred_check
        _
      $region10: #{tpu_custom_call.1} parent=5 // pred_check_branch
        %254 = sbr.rel (%p251) target = $region12
      $region11: #{tpu_custom_call.1} parent=5 // pred_region
        %s255 = ssub.s32 %s21, 1
        // Predicated region
        $region13: #{tpu_custom_call.1} parent=11 // pred_check
          %p256 = pneg %p68
        $region14: #{tpu_custom_call.1} parent=11 // pred_check_branch
          %258 = sbr.rel (%p256) target = $region16
        $region15: #{tpu_custom_call.1} parent=11 // pred_region
          %260 = vsyncadd [#allocation6], 0
          %s261 = sshll.u32 %s1, 4
          %s262 = int_to_ptr.hbm [resolvable:$true] %s261
          %s263 = sshll.u32 [#allocation5], 4
          %s264 = int_to_ptr.vmem [resolvable:$true] %s263
          %269 = dma.hbm_to_vmem [thread:$0]  %s262, 768, %s264, [#allocation6], 128, 128, 8
        $region16: #{tpu_custom_call.1} parent=11 // pred_fallthru
          _
        // Predicated region
        $region17: #{tpu_custom_call.1} parent=11 // pred_check
          %p270 = pneg %p89
        $region18: #{tpu_custom_call.1} parent=11 // pred_check_branch
          %272 = sbr.rel (%p270) target = $region20
        $region19: #{tpu_custom_call.1} parent=11 // pred_region
          %274 = vsyncadd [#allocation9], 0
          %s275 = sshll.u32 %s2, 4
          %s276 = int_to_ptr.hbm [resolvable:$true] %s275
          %s277 = sshll.u32 [#allocation8], 4
          %s278 = int_to_ptr.vmem [resolvable:$true] %s277
          %283 = dma.hbm_to_vmem [thread:$0]  %s276, 1536, %s278, [#allocation9], 128, 128, 8
        $region20: #{tpu_custom_call.1} parent=11 // pred_fallthru
          _
        // Predicated region
        $region21: #{tpu_custom_call.1} parent=11 // pred_check
          %p284 = pneg %p110
        $region22: #{tpu_custom_call.1} parent=11 // pred_check_branch
          %286 = sbr.rel (%p284) target = $region24
        $region23: #{tpu_custom_call.1} parent=11 // pred_region
          %288 = vsyncadd [#allocation9], 0
          %s290 = sshll.u32 %s3, 4
          %s291 = int_to_ptr.hbm [resolvable:$true] %s290
          %s292 = sshll.u32 [#allocation10], 4
          %s293 = int_to_ptr.vmem [resolvable:$true] %s292
          %295 = dma.hbm_to_vmem [thread:$0]  %s291, 32, %s293, [#allocation9]
        $region24: #{tpu_custom_call.1} parent=11 // pred_fallthru
          _
        // Predicated region
        $region25: #{tpu_custom_call.1} parent=11 // pred_check
          %p296 = pneg %p131
        $region26: #{tpu_custom_call.1} parent=11 // pred_check_branch
          %298 = sbr.rel (%p296) target = $region28
        $region27: #{tpu_custom_call.1} parent=11 // pred_region
          _
        $region28: #{tpu_custom_call.1} parent=11 // pred_fallthru
          _
        // Predicated region
        $region29: #{tpu_custom_call.1} parent=11 // pred_check
          %p299 = pneg %p152
        $region30: #{tpu_custom_call.1} parent=11 // pred_check_branch
          %301 = sbr.rel (%p299) target = $region32
        $region31: #{tpu_custom_call.1} parent=11 // pred_region
          %303 = vsyncadd [#allocation12], 0
          %s304 = sshll.u32 %s5, 4
          %s305 = int_to_ptr.hbm [resolvable:$true] %s304
          %s306 = sshll.u32 [#allocation11], 4
          %s307 = int_to_ptr.vmem [resolvable:$true] %s306
          %312 = dma.hbm_to_vmem [thread:$0]  %s305, 1024, %s307, [#allocation12], 128, 128, 8
        $region32: #{tpu_custom_call.1} parent=11 // pred_fallthru
          _
        // Predicated region
        $region33: #{tpu_custom_call.1} parent=11 // pred_check
          %p313 = pneg %p173
        $region34: #{tpu_custom_call.1} parent=11 // pred_check_branch
          %315 = sbr.rel (%p313) target = $region36
        $region35: #{tpu_custom_call.1} parent=11 // pred_region
          _
        $region36: #{tpu_custom_call.1} parent=11 // pred_fallthru
          _
        // Predicated region
        $region37: #{tpu_custom_call.1} parent=11 // pred_check
          %p316 = pneg %p194
        $region38: #{tpu_custom_call.1} parent=11 // pred_check_branch
          %318 = sbr.rel (%p316) target = $region40
        $region39: #{tpu_custom_call.1} parent=11 // pred_region
          _
        $region40: #{tpu_custom_call.1} parent=11 // pred_fallthru
          _
        // Predicated region
        $region41: #{tpu_custom_call.1} parent=11 // pred_check
          %p319 = pneg %p215
        $region42: #{tpu_custom_call.1} parent=11 // pred_check_branch
          %321 = sbr.rel (%p319) target = $region44
        $region43: #{tpu_custom_call.1} parent=11 // pred_region
          _
        $region44: #{tpu_custom_call.1} parent=11 // pred_fallthru
          _
      $region12: #{tpu_custom_call.1} parent=5 // pred_fallthru
        _
      %p322 = scmp.lt.s32.totalorder %s21, 2
      // Predicated region
      $region45: #{tpu_custom_call.1} parent=5 // pred_check
        %p323 = pneg %p322
      $region46: #{tpu_custom_call.1} parent=5 // pred_check_branch
        %325 = sbr.rel (%p323) target = $region48
      $region47: #{tpu_custom_call.1} parent=5 // pred_region
        // Predicated region
        $region49: #{tpu_custom_call.1} parent=47 // pred_check
          %p326 = pneg %p41
        $region50: #{tpu_custom_call.1} parent=47 // pred_check_branch
          %328 = sbr.rel (%p326) target = $region52
        $region51: #{tpu_custom_call.1} parent=47 // pred_region
          %p329 = scmp.lt.s32.totalorder %s21, 1
          %s330 = scalar_select %p329, %s21, 1
          %s331 = smul.addr %s330, 8
          %s332 = scalar_lea.vmem %s0, %s331
        $region52: #{tpu_custom_call.1} parent=47 // pred_fallthru
          _
      $region48: #{tpu_custom_call.1} parent=5 // pred_fallthru
        _
      %p333 = scmp.le.s32.totalorder 1, %s21
      %p334 = scmp.lt.s32.totalorder %s21, 3
      %p335 = pnand %p333, %p334
      %p336 = pneg %p335
      // Predicated region
      $region53: #{tpu_custom_call.1} parent=5 // pred_check
        _
      $region54: #{tpu_custom_call.1} parent=5 // pred_check_branch
        %338 = sbr.rel (%p335) target = $region56
      $region55: #{tpu_custom_call.1} parent=5 // pred_region
        %s339 = ssub.s32 %s21, 1
        // Predicated region
        $region57: #{tpu_custom_call.1} parent=55 // pred_check
          %p340 = pneg %p68
        $region58: #{tpu_custom_call.1} parent=55 // pred_check_branch
          %342 = sbr.rel (%p340) target = $region60
        $region59: #{tpu_custom_call.1} parent=55 // pred_region
          %344 = dma.done [#allocation6], 768
        $region60: #{tpu_custom_call.1} parent=55 // pred_fallthru
          _
        // Predicated region
        $region61: #{tpu_custom_call.1} parent=55 // pred_check
          %p345 = pneg %p89
        $region62: #{tpu_custom_call.1} parent=55 // pred_check_branch
          %347 = sbr.rel (%p345) target = $region64
        $region63: #{tpu_custom_call.1} parent=55 // pred_region
          %349 = dma.done [#allocation9], 1536
        $region64: #{tpu_custom_call.1} parent=55 // pred_fallthru
          _
        // Predicated region
        $region65: #{tpu_custom_call.1} parent=55 // pred_check
          %p350 = pneg %p110
        $region66: #{tpu_custom_call.1} parent=55 // pred_check_branch
          %352 = sbr.rel (%p350) target = $region68
        $region67: #{tpu_custom_call.1} parent=55 // pred_region
          %354 = dma.done [#allocation9], 32
        $region68: #{tpu_custom_call.1} parent=55 // pred_fallthru
          _
        // Predicated region
        $region69: #{tpu_custom_call.1} parent=55 // pred_check
          %p355 = pneg %p152
        $region70: #{tpu_custom_call.1} parent=55 // pred_check_branch
          %357 = sbr.rel (%p355) target = $region72
        $region71: #{tpu_custom_call.1} parent=55 // pred_region
          %359 = dma.done [#allocation12], 1024
        $region72: #{tpu_custom_call.1} parent=55 // pred_fallthru
          _
        %p360 = scmp.lt.s32.totalorder %s26, 1
        %s361 = scalar_select %p360, %s26, 1
        %s362 = smul.addr %s361, 8
        %s363 = scalar_lea.vmem %s0, %s362
        %p364 = pneg %p47
        %p365 = pneg %p44
        %p366 = pneg %p68
        %p367 = pneg %p65
        %p368 = pneg %p89
        %p369 = pneg %p86
        %p370 = pneg %p110
        %p371 = pneg %p107
        %p372 = pneg %p131
        %p373 = pneg %p128
        %p374 = pneg %p152
        %p375 = pneg %p149
        %p376 = pneg %p173
        %p377 = pneg %p170
        %p378 = pneg %p194
        %p379 = pneg %p191
        %p380 = pneg %p215
        %p381 = pneg %p212
        %p382 = pneg %p241
        %p383 = pneg %p238
        %s384 = sand.u32 %s228, 1
        %s385 = scalar_lea.sflag [#allocation7], %s384
        %s386 = sand.u32 %s228, 1
        %s387 = scalar_lea.vmem [#allocation13], %s386
        %p388 = scmp.lt.s32.totalorder %s26, 1
        %s389 = scalar_select %p388, %s26, 1
        %s390 = smul.addr %s389, 8
        %s391 = scalar_lea.vmem %s0, %s390
        %v392 = vld [vmem:[%s391] sm:$0xff]
        %vm393 = vcmask 122880
        %394 = vst.msk [vmem:[#allocation2] sm:$0x1] %vm393, 0.0
        %395 = vst.msk [vmem:[#allocation2 + $0x9] sm:$0x1] %vm393, 0.0
        %vm396 = vcmask 130048
        %397 = vst.msk [vmem:[#allocation2 + $0x1] sm:$0xff] %vm396, %v392
        %v398 = vld [vmem:[#allocation10] sm:$0x3]
        %v399 = vld [vmem:[#allocation2] sm:$0xff]
        %v400 = vld [vmem:[#allocation5] sm:$0xff]
        %v401 = vld [vmem:[#allocation5 + $0x8] sm:$0xff]
        %s402 = scalar_lea.vmem [#allocation5], 16
        %v403 = vld [vmem:[%s402] sm:$0xff]
        %v404 = vld [vmem:[%s402 + $0x8] sm:$0xff]
        %v406 = vsel %vm396, %v392, 0
        %408 = vmatpush.msra.mxu0 0.0
        %409 = vmatpush.msra.mxu0 0.0
        %410 = vmatpush.msra.mxu0 0.0
        %411 = vmatpush.msra.mxu0 0.0
        %412 = vmatpush.msra.mxu0 0.0
        %413 = vmatpush.msra.mxu0 0.0
        %414 = vmatpush.msra.mxu0 0.0
        %415 = vmatpush.msra.mxu0 0.0
        %416 = vmatpush.msra.mxu0 0.0
        %417 = vmatpush.msra.mxu0 0.0
        %418 = vmatpush.msra.mxu0 0.0
        %419 = vmatpush.msra.mxu0 0.0
        %420 = vmatpush.msra.mxu0 0.0
        %421 = vmatpush.msra.mxu0 0.0
        %422 = vmatpush.msra.mxu0 %v404
        %423 = vmatpush.msra.mxu0 %v403
        %424 = vmatmul.f32.gmra.mxu0 %v406
        %v425 = vpop.f32.mrf.mxu0
        %v426 = vadd.f32 0.0, %v425
        %427 = vdwg.mxu0
        %v429 = vsel %vm396, %v399, 0
        %431 = vmatpush.msra.mxu0 0.0
        %432 = vmatpush.msra.mxu0 0.0
        %433 = vmatpush.msra.mxu0 0.0
        %434 = vmatpush.msra.mxu0 0.0
        %435 = vmatpush.msra.mxu0 0.0
        %436 = vmatpush.msra.mxu0 0.0
        %437 = vmatpush.msra.mxu0 0.0
        %438 = vmatpush.msra.mxu0 0.0
        %439 = vmatpush.msra.mxu0 0.0
        %440 = vmatpush.msra.mxu0 0.0
        %441 = vmatpush.msra.mxu0 0.0
        %442 = vmatpush.msra.mxu0 0.0
        %443 = vmatpush.msra.mxu0 0.0
        %444 = vmatpush.msra.mxu0 0.0
        %445 = vmatpush.msra.mxu0 %v401
        %446 = vmatpush.msra.mxu0 %v400
        %447 = vmatmul.f32.gmra.mxu0 %v429
        %v448 = vpop.f32.mrf.mxu0
        %v449 = vadd.f32 %v426, %v448
        %450 = vdwg.mxu0
        %v451 = vld [vmem:[#allocation2 + $0x2] sm:$0xff]
        %s452 = scalar_lea.vmem [#allocation5], 32
        %v453 = vld [vmem:[%s452] sm:$0xff]
        %v454 = vld [vmem:[%s452 + $0x8] sm:$0xff]
        %v456 = vsel %vm396, %v451, 0
        %458 = vmatpush.msra.mxu0 0.0
        %459 = vmatpush.msra.mxu0 0.0
        %460 = vmatpush.msra.mxu0 0.0
        %461 = vmatpush.msra.mxu0 0.0
        %462 = vmatpush.msra.mxu0 0.0
        %463 = vmatpush.msra.mxu0 0.0
        %464 = vmatpush.msra.mxu0 0.0
        %465 = vmatpush.msra.mxu0 0.0
        %466 = vmatpush.msra.mxu0 0.0
        %467 = vmatpush.msra.mxu0 0.0
        %468 = vmatpush.msra.mxu0 0.0
        %469 = vmatpush.msra.mxu0 0.0
        %470 = vmatpush.msra.mxu0 0.0
        %471 = vmatpush.msra.mxu0 0.0
        %472 = vmatpush.msra.mxu0 %v454
        %473 = vmatpush.msra.mxu0 %v453
        %474 = vmatmul.f32.gmra.mxu0 %v456
        %v475 = vpop.f32.mrf.mxu0
        %v476 = vadd.f32 0.0, %v475
        %477 = vdwg.mxu0
        %v478 = vadd.f32 %v449, %v476
        %v479 = vperm.slane %v398, 0
        %v480 = vadd.f32 %v478, %v479
        %v481 = vmax.f32 %v480, 0.0
        %vm482 = vcmask 253952
        %483 = vst.msk [vmem:[#allocation3] sm:$0x1] %vm482, 0.0
        %484 = vst.msk [vmem:[#allocation3 + $0x9] sm:$0x1] %vm482, 0.0
        %vm485 = vcmask 261120
        %486 = vst.msk [vmem:[#allocation3 + $0x1] sm:$0xff] %vm485, %v481
        %v487 = vld [vmem:[#allocation3] sm:$0xff]
        %v488 = vld [vmem:[#allocation8] sm:$0xff]
        %v489 = vld [vmem:[#allocation8 + $0x8] sm:$0xff]
        %v490 = vld [vmem:[#allocation8 + $0x10] sm:$0xff]
        %v491 = vld [vmem:[#allocation8 + $0x18] sm:$0xff]
        %s492 = scalar_lea.vmem [#allocation8], 32
        %v493 = vld [vmem:[%s492] sm:$0xff]
        %v494 = vld [vmem:[%s492 + $0x8] sm:$0xff]
        %v495 = vld [vmem:[%s492 + $0x10] sm:$0xff]
        %v496 = vld [vmem:[%s492 + $0x18] sm:$0xff]
        %v498 = vsel %vm485, %v481, 0
        %500 = vmatpush.msra.mxu0 0.0
        %501 = vmatpush.msra.mxu0 0.0
        %502 = vmatpush.msra.mxu0 0.0
        %503 = vmatpush.msra.mxu0 0.0
        %504 = vmatpush.msra.mxu0 0.0
        %505 = vmatpush.msra.mxu0 0.0
        %506 = vmatpush.msra.mxu0 0.0
        %507 = vmatpush.msra.mxu0 0.0
        %508 = vmatpush.msra.mxu0 0.0
        %509 = vmatpush.msra.mxu0 0.0
        %510 = vmatpush.msra.mxu0 0.0
        %511 = vmatpush.msra.mxu0 0.0
        %512 = vmatpush.msra.mxu0 %v496
        %513 = vmatpush.msra.mxu0 %v495
        %514 = vmatpush.msra.mxu0 %v494
        %515 = vmatpush.msra.mxu0 %v493
        %516 = vmatmul.f32.gmra.mxu0 %v498
        %v517 = vpop.f32.mrf.mxu0
        %v518 = vadd.f32 0.0, %v517
        %519 = vdwg.mxu0
        %v521 = vsel %vm485, %v487, 0
        %523 = vmatpush.msra.mxu0 0.0
        %524 = vmatpush.msra.mxu0 0.0
        %525 = vmatpush.msra.mxu0 0.0
        %526 = vmatpush.msra.mxu0 0.0
        %527 = vmatpush.msra.mxu0 0.0
        %528 = vmatpush.msra.mxu0 0.0
        %529 = vmatpush.msra.mxu0 0.0
        %530 = vmatpush.msra.mxu0 0.0
        %531 = vmatpush.msra.mxu0 0.0
        %532 = vmatpush.msra.mxu0 0.0
        %533 = vmatpush.msra.mxu0 0.0
        %534 = vmatpush.msra.mxu0 0.0
        %535 = vmatpush.msra.mxu0 %v491
        %536 = vmatpush.msra.mxu0 %v490
        %537 = vmatpush.msra.mxu0 %v489
        %538 = vmatpush.msra.mxu0 %v488
        %539 = vmatmul.f32.gmra.mxu0 %v521
        %v540 = vpop.f32.mrf.mxu0
        %v541 = vadd.f32 %v518, %v540
        %542 = vdwg.mxu0
        %v543 = vld [vmem:[#allocation3 + $0x2] sm:$0xff]
        %s544 = scalar_lea.vmem [#allocation8], 64
        %v545 = vld [vmem:[%s544] sm:$0xff]
        %v546 = vld [vmem:[%s544 + $0x8] sm:$0xff]
        %v547 = vld [vmem:[%s544 + $0x10] sm:$0xff]
        %v548 = vld [vmem:[%s544 + $0x18] sm:$0xff]
        %v550 = vsel %vm485, %v543, 0
        %552 = vmatpush.msra.mxu0 0.0
        %553 = vmatpush.msra.mxu0 0.0
        %554 = vmatpush.msra.mxu0 0.0
        %555 = vmatpush.msra.mxu0 0.0
        %556 = vmatpush.msra.mxu0 0.0
        %557 = vmatpush.msra.mxu0 0.0
        %558 = vmatpush.msra.mxu0 0.0
        %559 = vmatpush.msra.mxu0 0.0
        %560 = vmatpush.msra.mxu0 0.0
        %561 = vmatpush.msra.mxu0 0.0
        %562 = vmatpush.msra.mxu0 0.0
        %563 = vmatpush.msra.mxu0 0.0
        %564 = vmatpush.msra.mxu0 %v548
        %565 = vmatpush.msra.mxu0 %v547
        %566 = vmatpush.msra.mxu0 %v546
        %567 = vmatpush.msra.mxu0 %v545
        %568 = vmatmul.f32.gmra.mxu0 %v550
        %v569 = vpop.f32.mrf.mxu0
        %v570 = vadd.f32 0.0, %v569
        %571 = vdwg.mxu0
        %v572 = vadd.f32 %v541, %v570
        %v573 = vperm.slane %v398, 1
        %v574 = vadd.f32 %v572, %v573
        %v575 = vmax.f32 %v574, 0.0
        %v576 = vld [vmem:[%s6] sm:$0x3]
        %v577 = vld [vmem:[%s4] sm:$0xff]
        %v578 = vld [vmem:[%s4 + $0x8] sm:$0xff]
        %v579 = vld [vmem:[%s4 + $0x10] sm:$0xff]
        %v580 = vld [vmem:[%s4 + $0x18] sm:$0xff]
        %v581 = vperm.slane %v576, 0
        %v583 = vsel %vm485, %v575, 0
        %585 = vmatpush.msra.mxu0 0.0
        %586 = vmatpush.msra.mxu0 0.0
        %587 = vmatpush.msra.mxu0 0.0
        %588 = vmatpush.msra.mxu0 0.0
        %589 = vmatpush.msra.mxu0 0.0
        %590 = vmatpush.msra.mxu0 0.0
        %591 = vmatpush.msra.mxu0 0.0
        %592 = vmatpush.msra.mxu0 0.0
        %593 = vmatpush.msra.mxu0 0.0
        %594 = vmatpush.msra.mxu0 0.0
        %595 = vmatpush.msra.mxu0 0.0
        %596 = vmatpush.msra.mxu0 0.0
        %597 = vmatpush.msra.mxu0 %v580
        %598 = vmatpush.msra.mxu0 %v579
        %599 = vmatpush.msra.mxu0 %v578
        %600 = vmatpush.msra.mxu0 %v577
        %601 = vmatmul.f32.gmra.mxu0 %v583
        %v602 = vpop.f32.mrf.mxu0
        %v603 = vadd.f32 %v581, %v602
        %604 = vdwg.mxu0
        %vm605 = vcmask 785408
        %606 = vst.msk [vmem:[#allocation4] sm:$0xff] %vm605, %v603
        %v607 = vld [vmem:[#allocation11] sm:$0xff]
        %v608 = vld [vmem:[#allocation11 + $0x8] sm:$0xff]
        %v609 = vld [vmem:[#allocation11 + $0x10] sm:$0xff]
        %v610 = vld [vmem:[#allocation11 + $0x18] sm:$0xff]
        %v611 = vld [vmem:[#allocation4] sm:$0x1]
        %v613 = vsel %vm485, 0.0, 0
        %615 = vmatpush.msra.mxu0 0.0
        %616 = vmatpush.msra.mxu0 0.0
        %617 = vmatpush.msra.mxu0 0.0
        %618 = vmatpush.msra.mxu0 0.0
        %619 = vmatpush.msra.mxu0 0.0
        %620 = vmatpush.msra.mxu0 0.0
        %621 = vmatpush.msra.mxu0 0.0
        %622 = vmatpush.msra.mxu0 0.0
        %623 = vmatpush.msra.mxu0 0.0
        %624 = vmatpush.msra.mxu0 0.0
        %625 = vmatpush.msra.mxu0 0.0
        %626 = vmatpush.msra.mxu0 0.0
        %627 = vmatpush.msra.mxu0 %v610
        %628 = vmatpush.msra.mxu0 %v609
        %629 = vmatpush.msra.mxu0 %v608
        %630 = vmatpush.msra.mxu0 %v607
        %631 = vmatmul.f32.gmra.mxu0 %v613
        %v632 = vpop.f32.mrf.mxu0
        %v633 = vadd.f32 0.0, %v632
        %634 = vdwg.mxu0
        %v635 = vadd.f32 %v611, %v633
        %v636 = vxor.u32 %v635, 2147483648
        %v637 = vmul.f32 %v636, 1.442695
        %v638 = vpow.pop %v637
        %v639 = vadd.f32 %v638, 1.0
        %v640 = vrcp.pop %v639
        %v641 = vmul.f32 %v639, %v640
        %v642 = vsub.f32 1.0, %v641
        %v643 = vmul.f32 %v640, %v642
        %v644 = vadd.f32 %v640, %v643
        %vm645 = vweird.f32 %v639
        %vm646 = vweird.f32 %v640
        %vm647 = vmor %vm645, %vm646
        %v648 = vsel %vm647, %v640, %v644
        %v649 = vand.u32 2147483647, %v639
        %vm650 = vcmp.eq.f32.partialorder %v649, 8.507059e+37
        %v651 = vand.u32 %v639, 2147483648
        %v652 = vor.u32 1.1754944e-38, %v651
        %v653 = vsel %vm650, %v652, %v648
        %v654 = vmul.f32 1.0, %v653
        %v656 = vrot.slane %v576, 1
        %v658 = vadd.f32 %v633, %v656
        %660 = vrot.lane.b32.xlu0 %v658, 64
        %v661 = vpop.permute.xlu0 %660
        %v663 = vmul.f32 %v654, %v661
        %665 = vrot.lane.b32.xlu0 %v663, 64
        %v666 = vpop.permute.xlu0 %665
        %v668 = vadd.f32 %v611, %v666
        %v669 = vtanh.pop %v668
        %v670 = vsub.f32 1.0, %v654
        %672 = vrot.lane.b32.xlu0 %v669, 96
        %v673 = vpop.permute.xlu0 %672
        %v675 = vmul.f32 %v670, %v673
        %v676 = vmul.f32 %v654, 0.0
        %v677 = vadd.f32 %v675, %v676
        %v678 = vld [vmem:[#allocation4 + $0x1] sm:$0x1]
        %680 = vrot.lane.b32.xlu0 %v677, 96
        %v681 = vpop.permute.xlu0 %680
        %v682 = vsel %vm485, %v681, 0
        %684 = vmatpush.msra.mxu0 0.0
        %685 = vmatpush.msra.mxu0 0.0
        %686 = vmatpush.msra.mxu0 0.0
        %687 = vmatpush.msra.mxu0 0.0
        %688 = vmatpush.msra.mxu0 0.0
        %689 = vmatpush.msra.mxu0 0.0
        %690 = vmatpush.msra.mxu0 0.0
        %691 = vmatpush.msra.mxu0 0.0
        %692 = vmatpush.msra.mxu0 0.0
        %693 = vmatpush.msra.mxu0 0.0
        %694 = vmatpush.msra.mxu0 0.0
        %695 = vmatpush.msra.mxu0 0.0
        %696 = vmatpush.msra.mxu0 %v610
        %697 = vmatpush.msra.mxu0 %v609
        %698 = vmatpush.msra.mxu0 %v608
        %699 = vmatpush.msra.mxu0 %v607
        %700 = vmatmul.f32.gmra.mxu0 %v682
        %v701 = vpop.f32.mrf.mxu0
        %v702 = vadd.f32 0.0, %v701
        %703 = vdwg.mxu0
        %v704 = vadd.f32 %v678, %v702
        %v705 = vxor.u32 %v704, 2147483648
        %v706 = vmul.f32 %v705, 1.442695
        %v707 = vpow.pop %v706
        %v708 = vadd.f32 %v707, 1.0
        %v709 = vrcp.pop %v708
        %v710 = vmul.f32 %v708, %v709
        %v711 = vsub.f32 1.0, %v710
        %v712 = vmul.f32 %v709, %v711
        %v713 = vadd.f32 %v709, %v712
        %vm714 = vweird.f32 %v708
        %vm715 = vweird.f32 %v709
        %vm716 = vmor %vm714, %vm715
        %v717 = vsel %vm716, %v709, %v713
        %v718 = vand.u32 2147483647, %v708
        %vm719 = vcmp.eq.f32.partialorder %v718, 8.507059e+37
        %v720 = vand.u32 %v708, 2147483648
        %v721 = vor.u32 1.1754944e-38, %v720
        %v722 = vsel %vm719, %v721, %v717
        %v723 = vmul.f32 1.0, %v722
        %v724 = vadd.f32 %v702, %v656
        %726 = vrot.lane.b32.xlu0 %v724, 64
        %v727 = vpop.permute.xlu0 %726
        %v729 = vmul.f32 %v723, %v727
        %731 = vrot.lane.b32.xlu0 %v729, 64
        %v732 = vpop.permute.xlu0 %731
        %v734 = vadd.f32 %v678, %v732
        %v735 = vtanh.pop %v734
        %v736 = vsub.f32 1.0, %v723
        %738 = vrot.lane.b32.xlu0 %v735, 96
        %v739 = vpop.permute.xlu0 %738
        %v741 = vmul.f32 %v736, %v739
        %v742 = vmul.f32 %v723, %v677
        %v743 = vadd.f32 %v741, %v742
        %v744 = vld [vmem:[#allocation4 + $0x2] sm:$0x1]
        %746 = vrot.lane.b32.xlu0 %v743, 96
        %v747 = vpop.permute.xlu0 %746
        %v748 = vsel %vm485, %v747, 0
        %750 = vmatpush.msra.mxu0 0.0
        %751 = vmatpush.msra.mxu0 0.0
        %752 = vmatpush.msra.mxu0 0.0
        %753 = vmatpush.msra.mxu0 0.0
        %754 = vmatpush.msra.mxu0 0.0
        %755 = vmatpush.msra.mxu0 0.0
        %756 = vmatpush.msra.mxu0 0.0
        %757 = vmatpush.msra.mxu0 0.0
        %758 = vmatpush.msra.mxu0 0.0
        %759 = vmatpush.msra.mxu0 0.0
        %760 = vmatpush.msra.mxu0 0.0
        %761 = vmatpush.msra.mxu0 0.0
        %762 = vmatpush.msra.mxu0 %v610
        %763 = vmatpush.msra.mxu0 %v609
        %764 = vmatpush.msra.mxu0 %v608
        %765 = vmatpush.msra.mxu0 %v607
        %766 = vmatmul.f32.gmra.mxu0 %v748
        %v767 = vpop.f32.mrf.mxu0
        %v768 = vadd.f32 0.0, %v767
        %769 = vdwg.mxu0
        %v770 = vadd.f32 %v744, %v768
        %v771 = vxor.u32 %v770, 2147483648
        %v772 = vmul.f32 %v771, 1.442695
        %v773 = vpow.pop %v772
        %v774 = vadd.f32 %v773, 1.0
        %v775 = vrcp.pop %v774
        %v776 = vmul.f32 %v774, %v775
        %v777 = vsub.f32 1.0, %v776
        %v778 = vmul.f32 %v775, %v777
        %v779 = vadd.f32 %v775, %v778
        %vm780 = vweird.f32 %v774
        %vm781 = vweird.f32 %v775
        %vm782 = vmor %vm780, %vm781
        %v783 = vsel %vm782, %v775, %v779
        %v784 = vand.u32 2147483647, %v774
        %vm785 = vcmp.eq.f32.partialorder %v784, 8.507059e+37
        %v786 = vand.u32 %v774, 2147483648
        %v787 = vor.u32 1.1754944e-38, %v786
        %v788 = vsel %vm785, %v787, %v783
        %v789 = vmul.f32 1.0, %v788
        %v790 = vadd.f32 %v768, %v656
        %792 = vrot.lane.b32.xlu0 %v790, 64
        %v793 = vpop.permute.xlu0 %792
        %v795 = vmul.f32 %v789, %v793
        %797 = vrot.lane.b32.xlu0 %v795, 64
        %v798 = vpop.permute.xlu0 %797
        %v800 = vadd.f32 %v744, %v798
        %v801 = vtanh.pop %v800
        %v802 = vsub.f32 1.0, %v789
        %804 = vrot.lane.b32.xlu0 %v801, 96
        %v805 = vpop.permute.xlu0 %804
        %v807 = vmul.f32 %v802, %v805
        %v808 = vmul.f32 %v789, %v743
        %v809 = vadd.f32 %v807, %v808
        %v810 = vld [vmem:[#allocation4 + $0x3] sm:$0x1]
        %812 = vrot.lane.b32.xlu0 %v809, 96
        %v813 = vpop.permute.xlu0 %812
        %v814 = vsel %vm485, %v813, 0
        %816 = vmatpush.msra.mxu0 0.0
        %817 = vmatpush.msra.mxu0 0.0
        %818 = vmatpush.msra.mxu0 0.0
        %819 = vmatpush.msra.mxu0 0.0
        %820 = vmatpush.msra.mxu0 0.0
        %821 = vmatpush.msra.mxu0 0.0
        %822 = vmatpush.msra.mxu0 0.0
        %823 = vmatpush.msra.mxu0 0.0
        %824 = vmatpush.msra.mxu0 0.0
        %825 = vmatpush.msra.mxu0 0.0
        %826 = vmatpush.msra.mxu0 0.0
        %827 = vmatpush.msra.mxu0 0.0
        %828 = vmatpush.msra.mxu0 %v610
        %829 = vmatpush.msra.mxu0 %v609
        %830 = vmatpush.msra.mxu0 %v608
        %831 = vmatpush.msra.mxu0 %v607
        %832 = vmatmul.f32.gmra.mxu0 %v814
        %v833 = vpop.f32.mrf.mxu0
        %v834 = vadd.f32 0.0, %v833
        %835 = vdwg.mxu0
        %v836 = vadd.f32 %v810, %v834
        %v837 = vxor.u32 %v836, 2147483648
        %v838 = vmul.f32 %v837, 1.442695
        %v839 = vpow.pop %v838
        %v840 = vadd.f32 %v839, 1.0
        %v841 = vrcp.pop %v840
        %v842 = vmul.f32 %v840, %v841
        %v843 = vsub.f32 1.0, %v842
        %v844 = vmul.f32 %v841, %v843
        %v845 = vadd.f32 %v841, %v844
        %vm846 = vweird.f32 %v840
        %vm847 = vweird.f32 %v841
        %vm848 = vmor %vm846, %vm847
        %v849 = vsel %vm848, %v841, %v845
        %v850 = vand.u32 2147483647, %v840
        %vm851 = vcmp.eq.f32.partialorder %v850, 8.507059e+37
        %v852 = vand.u32 %v840, 2147483648
        %v853 = vor.u32 1.1754944e-38, %v852
        %v854 = vsel %vm851, %v853, %v849
        %v855 = vmul.f32 1.0, %v854
        %v856 = vadd.f32 %v834, %v656
        %858 = vrot.lane.b32.xlu0 %v856, 64
        %v859 = vpop.permute.xlu0 %858
        %v861 = vmul.f32 %v855, %v859
        %863 = vrot.lane.b32.xlu0 %v861, 64
        %v864 = vpop.permute.xlu0 %863
        %v866 = vadd.f32 %v810, %v864
        %v867 = vtanh.pop %v866
        %v868 = vsub.f32 1.0, %v855
        %870 = vrot.lane.b32.xlu0 %v867, 96
        %v871 = vpop.permute.xlu0 %870
        %v873 = vmul.f32 %v868, %v871
        %v874 = vmul.f32 %v855, %v809
        %v875 = vadd.f32 %v873, %v874
        %v876 = vld [vmem:[#allocation4 + $0x4] sm:$0x1]
        %878 = vrot.lane.b32.xlu0 %v875, 96
        %v879 = vpop.permute.xlu0 %878
        %v880 = vsel %vm485, %v879, 0
        %882 = vmatpush.msra.mxu0 0.0
        %883 = vmatpush.msra.mxu0 0.0
        %884 = vmatpush.msra.mxu0 0.0
        %885 = vmatpush.msra.mxu0 0.0
        %886 = vmatpush.msra.mxu0 0.0
        %887 = vmatpush.msra.mxu0 0.0
        %888 = vmatpush.msra.mxu0 0.0
        %889 = vmatpush.msra.mxu0 0.0
        %890 = vmatpush.msra.mxu0 0.0
        %891 = vmatpush.msra.mxu0 0.0
        %892 = vmatpush.msra.mxu0 0.0
        %893 = vmatpush.msra.mxu0 0.0
        %894 = vmatpush.msra.mxu0 %v610
        %895 = vmatpush.msra.mxu0 %v609
        %896 = vmatpush.msra.mxu0 %v608
        %897 = vmatpush.msra.mxu0 %v607
        %898 = vmatmul.f32.gmra.mxu0 %v880
        %v899 = vpop.f32.mrf.mxu0
        %v900 = vadd.f32 0.0, %v899
        %901 = vdwg.mxu0
        %v902 = vadd.f32 %v876, %v900
        %v903 = vxor.u32 %v902, 2147483648
        %v904 = vmul.f32 %v903, 1.442695
        %v905 = vpow.pop %v904
        %v906 = vadd.f32 %v905, 1.0
        %v907 = vrcp.pop %v906
        %v908 = vmul.f32 %v906, %v907
        %v909 = vsub.f32 1.0, %v908
        %v910 = vmul.f32 %v907, %v909
        %v911 = vadd.f32 %v907, %v910
        %vm912 = vweird.f32 %v906
        %vm913 = vweird.f32 %v907
        %vm914 = vmor %vm912, %vm913
        %v915 = vsel %vm914, %v907, %v911
        %v916 = vand.u32 2147483647, %v906
        %vm917 = vcmp.eq.f32.partialorder %v916, 8.507059e+37
        %v918 = vand.u32 %v906, 2147483648
        %v919 = vor.u32 1.1754944e-38, %v918
        %v920 = vsel %vm917, %v919, %v915
        %v921 = vmul.f32 1.0, %v920
        %v922 = vadd.f32 %v900, %v656
        %924 = vrot.lane.b32.xlu0 %v922, 64
        %v925 = vpop.permute.xlu0 %924
        %v927 = vmul.f32 %v921, %v925
        %929 = vrot.lane.b32.xlu0 %v927, 64
        %v930 = vpop.permute.xlu0 %929
        %v932 = vadd.f32 %v876, %v930
        %v933 = vtanh.pop %v932
        %v934 = vsub.f32 1.0, %v921
        %936 = vrot.lane.b32.xlu0 %v933, 96
        %v937 = vpop.permute.xlu0 %936
        %v939 = vmul.f32 %v934, %v937
        %v940 = vmul.f32 %v921, %v875
        %v941 = vadd.f32 %v939, %v940
        %v942 = vld [vmem:[#allocation4 + $0x5] sm:$0x1]
        %944 = vrot.lane.b32.xlu0 %v941, 96
        %v945 = vpop.permute.xlu0 %944
        %v946 = vsel %vm485, %v945, 0
        %948 = vmatpush.msra.mxu0 0.0
        %949 = vmatpush.msra.mxu0 0.0
        %950 = vmatpush.msra.mxu0 0.0
        %951 = vmatpush.msra.mxu0 0.0
        %952 = vmatpush.msra.mxu0 0.0
        %953 = vmatpush.msra.mxu0 0.0
        %954 = vmatpush.msra.mxu0 0.0
        %955 = vmatpush.msra.mxu0 0.0
        %956 = vmatpush.msra.mxu0 0.0
        %957 = vmatpush.msra.mxu0 0.0
        %958 = vmatpush.msra.mxu0 0.0
        %959 = vmatpush.msra.mxu0 0.0
        %960 = vmatpush.msra.mxu0 %v610
        %961 = vmatpush.msra.mxu0 %v609
        %962 = vmatpush.msra.mxu0 %v608
        %963 = vmatpush.msra.mxu0 %v607
        %964 = vmatmul.f32.gmra.mxu0 %v946
        %v965 = vpop.f32.mrf.mxu0
        %v966 = vadd.f32 0.0, %v965
        %967 = vdwg.mxu0
        %v968 = vadd.f32 %v942, %v966
        %v969 = vxor.u32 %v968, 2147483648
        %v970 = vmul.f32 %v969, 1.442695
        %v971 = vpow.pop %v970
        %v972 = vadd.f32 %v971, 1.0
        %v973 = vrcp.pop %v972
        %v974 = vmul.f32 %v972, %v973
        %v975 = vsub.f32 1.0, %v974
        %v976 = vmul.f32 %v973, %v975
        %v977 = vadd.f32 %v973, %v976
        %vm978 = vweird.f32 %v972
        %vm979 = vweird.f32 %v973
        %vm980 = vmor %vm978, %vm979
        %v981 = vsel %vm980, %v973, %v977
        %v982 = vand.u32 2147483647, %v972
        %vm983 = vcmp.eq.f32.partialorder %v982, 8.507059e+37
        %v984 = vand.u32 %v972, 2147483648
        %v985 = vor.u32 1.1754944e-38, %v984
        %v986 = vsel %vm983, %v985, %v981
        %v987 = vmul.f32 1.0, %v986
        %v988 = vadd.f32 %v966, %v656
        %990 = vrot.lane.b32.xlu0 %v988, 64
        %v991 = vpop.permute.xlu0 %990
        %v993 = vmul.f32 %v987, %v991
        %995 = vrot.lane.b32.xlu0 %v993, 64
        %v996 = vpop.permute.xlu0 %995
        %v998 = vadd.f32 %v942, %v996
        %v999 = vtanh.pop %v998
        %v1000 = vsub.f32 1.0, %v987
        %1002 = vrot.lane.b32.xlu0 %v999, 96
        %v1003 = vpop.permute.xlu0 %1002
        %v1005 = vmul.f32 %v1000, %v1003
        %v1006 = vmul.f32 %v987, %v941
        %v1007 = vadd.f32 %v1005, %v1006
        %v1008 = vld [vmem:[#allocation4 + $0x6] sm:$0x1]
        %1010 = vrot.lane.b32.xlu0 %v1007, 96
        %v1011 = vpop.permute.xlu0 %1010
        %v1012 = vsel %vm485, %v1011, 0
        %1014 = vmatpush.msra.mxu0 0.0
        %1015 = vmatpush.msra.mxu0 0.0
        %1016 = vmatpush.msra.mxu0 0.0
        %1017 = vmatpush.msra.mxu0 0.0
        %1018 = vmatpush.msra.mxu0 0.0
        %1019 = vmatpush.msra.mxu0 0.0
        %1020 = vmatpush.msra.mxu0 0.0
        %1021 = vmatpush.msra.mxu0 0.0
        %1022 = vmatpush.msra.mxu0 0.0
        %1023 = vmatpush.msra.mxu0 0.0
        %1024 = vmatpush.msra.mxu0 0.0
        %1025 = vmatpush.msra.mxu0 0.0
        %1026 = vmatpush.msra.mxu0 %v610
        %1027 = vmatpush.msra.mxu0 %v609
        %1028 = vmatpush.msra.mxu0 %v608
        %1029 = vmatpush.msra.mxu0 %v607
        %1030 = vmatmul.f32.gmra.mxu0 %v1012
        %v1031 = vpop.f32.mrf.mxu0
        %v1032 = vadd.f32 0.0, %v1031
        %1033 = vdwg.mxu0
        %v1034 = vadd.f32 %v1008, %v1032
        %v1035 = vxor.u32 %v1034, 2147483648
        %v1036 = vmul.f32 %v1035, 1.442695
        %v1037 = vpow.pop %v1036
        %v1038 = vadd.f32 %v1037, 1.0
        %v1039 = vrcp.pop %v1038
        %v1040 = vmul.f32 %v1038, %v1039
        %v1041 = vsub.f32 1.0, %v1040
        %v1042 = vmul.f32 %v1039, %v1041
        %v1043 = vadd.f32 %v1039, %v1042
        %vm1044 = vweird.f32 %v1038
        %vm1045 = vweird.f32 %v1039
        %vm1046 = vmor %vm1044, %vm1045
        %v1047 = vsel %vm1046, %v1039, %v1043
        %v1048 = vand.u32 2147483647, %v1038
        %vm1049 = vcmp.eq.f32.partialorder %v1048, 8.507059e+37
        %v1050 = vand.u32 %v1038, 2147483648
        %v1051 = vor.u32 1.1754944e-38, %v1050
        %v1052 = vsel %vm1049, %v1051, %v1047
        %v1053 = vmul.f32 1.0, %v1052
        %v1054 = vadd.f32 %v1032, %v656
        %1056 = vrot.lane.b32.xlu0 %v1054, 64
        %v1057 = vpop.permute.xlu0 %1056
        %v1059 = vmul.f32 %v1053, %v1057
        %1061 = vrot.lane.b32.xlu0 %v1059, 64
        %v1062 = vpop.permute.xlu0 %1061
        %v1064 = vadd.f32 %v1008, %v1062
        %v1065 = vtanh.pop %v1064
        %v1066 = vsub.f32 1.0, %v1053
        %1068 = vrot.lane.b32.xlu0 %v1065, 96
        %v1069 = vpop.permute.xlu0 %1068
        %v1071 = vmul.f32 %v1066, %v1069
        %v1072 = vmul.f32 %v1053, %v1007
        %v1073 = vadd.f32 %v1071, %v1072
        %v1074 = vld [vmem:[#allocation4 + $0x7] sm:$0x1]
        %1076 = vrot.lane.b32.xlu0 %v1073, 96
        %v1077 = vpop.permute.xlu0 %1076
        %v1078 = vsel %vm485, %v1077, 0
        %1080 = vmatpush.msra.mxu0 0.0
        %1081 = vmatpush.msra.mxu0 0.0
        %1082 = vmatpush.msra.mxu0 0.0
        %1083 = vmatpush.msra.mxu0 0.0
        %1084 = vmatpush.msra.mxu0 0.0
        %1085 = vmatpush.msra.mxu0 0.0
        %1086 = vmatpush.msra.mxu0 0.0
        %1087 = vmatpush.msra.mxu0 0.0
        %1088 = vmatpush.msra.mxu0 0.0
        %1089 = vmatpush.msra.mxu0 0.0
        %1090 = vmatpush.msra.mxu0 0.0
        %1091 = vmatpush.msra.mxu0 0.0
        %1092 = vmatpush.msra.mxu0 %v610
        %1093 = vmatpush.msra.mxu0 %v609
        %1094 = vmatpush.msra.mxu0 %v608
        %1095 = vmatpush.msra.mxu0 %v607
        %1096 = vmatmul.f32.gmra.mxu0 %v1078
        %v1097 = vpop.f32.mrf.mxu0
        %v1098 = vadd.f32 0.0, %v1097
        %1099 = vdwg.mxu0
        %v1100 = vadd.f32 %v1074, %v1098
        %v1101 = vxor.u32 %v1100, 2147483648
        %v1102 = vmul.f32 %v1101, 1.442695
        %v1103 = vpow.pop %v1102
        %v1104 = vadd.f32 %v1103, 1.0
        %v1105 = vrcp.pop %v1104
        %v1106 = vmul.f32 %v1104, %v1105
        %v1107 = vsub.f32 1.0, %v1106
        %v1108 = vmul.f32 %v1105, %v1107
        %v1109 = vadd.f32 %v1105, %v1108
        %vm1110 = vweird.f32 %v1104
        %vm1111 = vweird.f32 %v1105
        %vm1112 = vmor %vm1110, %vm1111
        %v1113 = vsel %vm1112, %v1105, %v1109
        %v1114 = vand.u32 2147483647, %v1104
        %vm1115 = vcmp.eq.f32.partialorder %v1114, 8.507059e+37
        %v1116 = vand.u32 %v1104, 2147483648
        %v1117 = vor.u32 1.1754944e-38, %v1116
        %v1118 = vsel %vm1115, %v1117, %v1113
        %v1119 = vmul.f32 1.0, %v1118
        %v1120 = vadd.f32 %v1098, %v656
        %1122 = vrot.lane.b32.xlu0 %v1120, 64
        %v1123 = vpop.permute.xlu0 %1122
        %v1125 = vmul.f32 %v1119, %v1123
        %1127 = vrot.lane.b32.xlu0 %v1125, 64
        %v1128 = vpop.permute.xlu0 %1127
        %v1130 = vadd.f32 %v1074, %v1128
        %v1131 = vtanh.pop %v1130
        %v1132 = vsub.f32 1.0, %v1119
        %1134 = vrot.lane.b32.xlu0 %v1131, 96
        %v1135 = vpop.permute.xlu0 %1134
        %v1137 = vmul.f32 %v1132, %v1135
        %v1138 = vmul.f32 %v1119, %v1073
        %v1139 = vadd.f32 %v1137, %v1138
        %s1140 = scalar_lea.vmem %s6, 2
        %v1141 = vld [vmem:[%s1140] sm:$0x3]
        %s1142 = scalar_lea.vmem %s4, 32
        %v1143 = vld [vmem:[%s1142] sm:$0xff]
        %v1144 = vld [vmem:[%s1142 + $0x8] sm:$0xff]
        %v1145 = vld [vmem:[%s1142 + $0x10] sm:$0xff]
        %v1146 = vld [vmem:[%s1142 + $0x18] sm:$0xff]
        %v1147 = vrot.slane %v575, 7
        %v1148 = vsel %vm485, %v1147, 0
        %1150 = vmatpush.msra.mxu0 0.0
        %1151 = vmatpush.msra.mxu0 0.0
        %1152 = vmatpush.msra.mxu0 0.0
        %1153 = vmatpush.msra.mxu0 0.0
        %1154 = vmatpush.msra.mxu0 0.0
        %1155 = vmatpush.msra.mxu0 0.0
        %1156 = vmatpush.msra.mxu0 0.0
        %1157 = vmatpush.msra.mxu0 0.0
        %1158 = vmatpush.msra.mxu0 0.0
        %1159 = vmatpush.msra.mxu0 0.0
        %1160 = vmatpush.msra.mxu0 0.0
        %1161 = vmatpush.msra.mxu0 0.0
        %1162 = vmatpush.msra.mxu0 %v1146
        %1163 = vmatpush.msra.mxu0 %v1145
        %1164 = vmatpush.msra.mxu0 %v1144
        %1165 = vmatpush.msra.mxu0 %v1143
        %1166 = vmatmul.f32.gmra.mxu0 %v1148
        %v1167 = vpop.f32.mrf.mxu0
        %v1168 = vadd.f32 %v1141, %v1167
        %1169 = vdwg.mxu0
        %v1170 = vxor.u32 %v1168, 2147483648
        %v1171 = vmul.f32 %v1170, 1.442695
        %v1172 = vpow.pop %v1171
        %v1173 = vadd.f32 %v1172, 1.0
        %v1174 = vrcp.pop %v1173
        %v1175 = vmul.f32 %v1173, %v1174
        %v1176 = vsub.f32 1.0, %v1175
        %v1177 = vmul.f32 %v1174, %v1176
        %v1178 = vadd.f32 %v1174, %v1177
        %vm1179 = vweird.f32 %v1173
        %vm1180 = vweird.f32 %v1174
        %vm1181 = vmor %vm1179, %vm1180
        %v1182 = vsel %vm1181, %v1174, %v1178
        %v1183 = vand.u32 2147483647, %v1173
        %vm1184 = vcmp.eq.f32.partialorder %v1183, 8.507059e+37
        %v1185 = vand.u32 %v1173, 2147483648
        %v1186 = vor.u32 1.1754944e-38, %v1185
        %v1187 = vsel %vm1184, %v1186, %v1182
        %v1188 = vmul.f32 1.0, %v1187
        %v1190 = vrot.slane %v1141, 1
        %1191 = vrot.lane.b32.xlu0 %v1190, 64
        %v1192 = vpop.permute.xlu0 %1191
        %v1194 = vmul.f32 %v1188, %v1192
        %1196 = vrot.lane.b32.xlu0 %v1194, 64
        %v1197 = vpop.permute.xlu0 %1196
        %v1199 = vadd.f32 %v1168, %v1197
        %v1200 = vtanh.pop %v1199
        %v1201 = vsub.f32 1.0, %v1188
        %1203 = vrot.lane.b32.xlu0 %v1200, 96
        %v1204 = vpop.permute.xlu0 %1203
        %v1206 = vmul.f32 %v1201, %v1204
        %v1207 = vld [vmem:[%s7] sm:$0xff]
        %v1208 = vld [vmem:[%s7 + $0x8] sm:$0xff]
        %v1209 = vld [vmem:[%s7 + $0x10] sm:$0xff]
        %v1210 = vld [vmem:[%s7 + $0x18] sm:$0xff]
        %v1211 = vld [vmem:[%s7 + $0x20] sm:$0xff]
        %v1212 = vld [vmem:[%s7 + $0x28] sm:$0xff]
        %v1213 = vld [vmem:[%s7 + $0x30] sm:$0xff]
        %v1214 = vld [vmem:[%s7 + $0x38] sm:$0xff]
        %1216 = vrot.lane.b32.xlu0 %v1206, 96
        %v1217 = vpop.permute.xlu0 %1216
        %v1218 = vsel %vm485, %v1217, 0
        %1220 = vmatpush.msra.mxu0 0.0
        %1221 = vmatpush.msra.mxu0 0.0
        %1222 = vmatpush.msra.mxu0 0.0
        %1223 = vmatpush.msra.mxu0 0.0
        %1224 = vmatpush.msra.mxu0 0.0
        %1225 = vmatpush.msra.mxu0 0.0
        %1226 = vmatpush.msra.mxu0 0.0
        %1227 = vmatpush.msra.mxu0 0.0
        %1228 = vmatpush.msra.mxu0 0.0
        %1229 = vmatpush.msra.mxu0 0.0
        %1230 = vmatpush.msra.mxu0 0.0
        %1231 = vmatpush.msra.mxu0 0.0
        %1232 = vmatpush.msra.mxu0 %v1214
        %1233 = vmatpush.msra.mxu0 %v1213
        %1234 = vmatpush.msra.mxu0 %v1212
        %1235 = vmatpush.msra.mxu0 %v1211
        %1236 = vmatmul.f32.gmra.mxu0 %v1218
        %v1237 = vpop.f32.mrf.mxu0
        %v1238 = vadd.f32 0.0, %v1237
        %1239 = vdwg.mxu0
        %1241 = vrot.lane.b32.xlu0 %v1139, 96
        %v1242 = vpop.permute.xlu0 %1241
        %v1243 = vsel %vm485, %v1242, 0
        %1245 = vmatpush.msra.mxu0 0.0
        %1246 = vmatpush.msra.mxu0 0.0
        %1247 = vmatpush.msra.mxu0 0.0
        %1248 = vmatpush.msra.mxu0 0.0
        %1249 = vmatpush.msra.mxu0 0.0
        %1250 = vmatpush.msra.mxu0 0.0
        %1251 = vmatpush.msra.mxu0 0.0
        %1252 = vmatpush.msra.mxu0 0.0
        %1253 = vmatpush.msra.mxu0 0.0
        %1254 = vmatpush.msra.mxu0 0.0
        %1255 = vmatpush.msra.mxu0 0.0
        %1256 = vmatpush.msra.mxu0 0.0
        %1257 = vmatpush.msra.mxu0 %v1210
        %1258 = vmatpush.msra.mxu0 %v1209
        %1259 = vmatpush.msra.mxu0 %v1208
        %1260 = vmatpush.msra.mxu0 %v1207
        %1261 = vmatmul.f32.gmra.mxu0 %v1243
        %v1262 = vpop.f32.mrf.mxu0
        %v1263 = vadd.f32 %v1238, %v1262
        %1264 = vdwg.mxu0
        %v1265 = vld [vmem:[%s8] sm:$0x1]
        %v1266 = vadd.f32 %v1263, %v1265
        %1267 = vst.msk [vmem:[%s387] sm:$0x1] %vm393, %v1266
        %s1268 = sand.u32 %s228, 1
        %s1269 = scalar_lea.sflag [#allocation7], %s1268
        %s1270 = sand.u32 %s228, 1
        %s1271 = scalar_lea.vmem [#allocation13], %s1270
        // Predicated region
        $region73: #{tpu_custom_call.1} parent=55 // pred_check
          %p1272 = pneg %p238
        $region74: #{tpu_custom_call.1} parent=55 // pred_check_branch
          %1274 = sbr.rel (%p1272) target = $region76
        $region75: #{tpu_custom_call.1} parent=55 // pred_region
          %1276 = vsyncadd %s1269, 0
          %s1277 = scalar_lea.hbm %s9, %s26
          %s1279 = sshll.u32 %s1271, 4
          %s1280 = int_to_ptr.vmem [resolvable:$true] %s1279
          %s1281 = sshll.u32 %s1277, 4
          %s1282 = int_to_ptr.hbm [resolvable:$true] %s1281
          %1284 = dma.vmem_to_hbm [thread:$0]  %s1280, 16, %s1282, %s1269
        $region76: #{tpu_custom_call.1} parent=55 // pred_fallthru
          _
      $region56: #{tpu_custom_call.1} parent=5 // pred_fallthru
        _
      %p1285 = scmp.le.s32.totalorder 2, %s21
      // Predicated region
      $region77: #{tpu_custom_call.1} parent=5 // pred_check
        %p1286 = pneg %p1285
      $region78: #{tpu_custom_call.1} parent=5 // pred_check_branch
        %1288 = sbr.rel (%p1286) target = $region80
      $region79: #{tpu_custom_call.1} parent=5 // pred_region
        %s1289 = ssub.s32 %s21, 2
        // Predicated region
        $region81: #{tpu_custom_call.1} parent=79 // pred_check
          %p1290 = pneg %p244
        $region82: #{tpu_custom_call.1} parent=79 // pred_check_branch
          %1292 = sbr.rel (%p1290) target = $region84
        $region83: #{tpu_custom_call.1} parent=79 // pred_region
          %s1293 = sand.u32 %s229, 1
          %s1294 = scalar_lea.sflag [#allocation7], %s1293
          %s1295 = sand.u32 %s229, 1
          %s1296 = scalar_lea.vmem [#allocation13], %s1295
          %1298 = dma.done %s1294, 16
        $region84: #{tpu_custom_call.1} parent=79 // pred_fallthru
          _
      $region80: #{tpu_custom_call.1} parent=5 // pred_fallthru
        _
    $region6: #{tpu_custom_call.1} parent=1 // loop_footer
      %s25 = sadd.s32 1, %s21
    $region7: #{tpu_custom_call.1} parent=1 // loop_footer_branch
      %20 = sbr.rel target = $region3
    $region8: #{tpu_custom_call.1} parent=1 // loop_exit
      _
    %1299 = vsyncpa [#allocation6], 1
    %s1300 = scalar_lea.sflag [#allocation6], 1
    %1301 = vsyncpa %s1300, 1
    %1302 = vsyncpa [#allocation9], 1
    %1303 = vsyncpa [#allocation12], 1
    %1304 = vsyncpa [#allocation7], 1
    %s1305 = scalar_lea.sflag [#allocation7], 1
    %1306 = vsyncpa %s1305, 1

</llo_original>
